<compile_context>
chip_gen: v6e
topology: v6e:2x2x1
jax: 0.10.0
libtpu: 0.0.40
codegen_flags: <defaults>
</compile_context>

<pallas_src>
import functools

import jax
import jax.numpy as jnp
from jax import lax
from jax.experimental import pallas as pl
from jax.experimental.pallas import tpu as pltpu

LANE = 128


def entmax15_kernel(const_ref, x_ref, o_ref, *, eps, n_valid):
    """const_ref: (2, Np, Np) f32, [0]=tie-break mask (j<i), [1]=first-diff matrix.
    x_ref / o_ref: (TB, Np)."""
    x = x_ref[...].astype(jnp.float32)
    tb, np_ = x.shape

    lane = lax.broadcasted_iota(jnp.int32, (1, np_), 1)          # 0..Np-1
    valid = lane < n_valid                                       # (1, Np)
    r_f = lane.astype(jnp.float32)

    neg_inf = jnp.float32(-jnp.inf)
    x_m = jnp.where(valid, x, neg_inf)
    max_val = jnp.max(x_m, axis=-1, keepdims=True)
    z = jnp.where(valid, (x - max_val) * 0.5, neg_inf)           # padded lanes -> -inf

    # ---- descending ranks (ties broken by original index), no sort primitive ----
    zi = z[:, :, None]                                           # (TB, Np, 1) element i
    zj = z[:, None, :]                                           # (TB, 1, Np) element j
    tie = const_ref[0] > 0.5                                     # (Np, Np): j < i
    before = (zj > zi) | ((zj == zi) & tie[None, :, :])
    rank = jnp.sum(before.astype(jnp.float32), axis=-1)          # (TB, Np)

    # ---- both cumulative sums in ONE fused batched MXU matmul ----
    mask_le = (rank[:, :, None] <= r_f[:, None, :]).astype(jnp.float32)   # (TB, Np, Np)
    zv = jnp.where(valid, z, 0.0)                                # padded contribute 0
    ch = lax.broadcasted_iota(jnp.int32, (1, 2, 1), 1)
    stacked = jnp.where(ch == 0, zv[:, None, :], (zv * zv)[:, None, :])   # (TB, 2, Np)
    csum = jnp.einsum("bci,bir->bcr", stacked, mask_le,
                      preferred_element_type=jnp.float32)        # (TB, 2, Np)
    cumsum = csum[:, 0, :]                                       # (TB, Np)
    cumsum_sq = csum[:, 1, :]                                    # (TB, Np)

    rho = r_f + 1.0                                              # 1..Np
    mean = cumsum / rho
    mean_sq = cumsum_sq / rho
    ss = rho * (mean_sq - mean * mean)
    delta = (1.0 - ss) / rho
    tau = mean - jnp.sqrt(jnp.maximum(delta, 0.0))               # (TB, Np)

    # sorted z (only needed for the support test) = first difference of prefix sums
    z_srt = jnp.dot(cumsum, const_ref[1], preferred_element_type=jnp.float32)

    support = (z_srt >= tau) & valid                             # padded ranks excluded
    support_size = jnp.sum(support.astype(jnp.float32), axis=-1, keepdims=True)
    safe_idx = jnp.clip(support_size, 1.0, float(n_valid)) - 1.0
    sel = (r_f == safe_idx).astype(jnp.float32)                  # (TB, Np) one-hot
    tau_star = jnp.sum(tau * sel, axis=-1, keepdims=True)        # (TB, 1)

    out = jnp.maximum(z - tau_star, 0.0)                         # padded lanes -> 0
    out = out * out
    norm = jnp.sum(out, axis=-1, keepdims=True) + eps
    # TODO(synk): the module's in-forward python print(...) debug dump is omitted
    # (host-side I/O has no Pallas equivalent).
    o_ref[...] = (out / norm).astype(o_ref.dtype)


def _vmem_capacity_bytes():
    try:
        info = pltpu.get_tpu_info()
        cap = getattr(info, "vmem_capacity_bytes", None)
        if cap:
            return int(cap)
    except Exception:
        pass
    return 64 * 1024 * 1024        # conservative default (v7x per-core VMEM)


def entmax15(x, eps=1e-8):
    B, N = x.shape
    Np = max(LANE, ((N + LANE - 1) // LANE) * LANE)

    # --- generation-adaptive batch-tile size / VMEM limit ---
    vmem_cap = _vmem_capacity_bytes()
    vmem_limit = int(min((vmem_cap * 3) // 4, 96 * 1024 * 1024))
    temp_budget = vmem_limit // 3                 # room for the (TB, Np, Np) temps
    per_row = 4 * Np * Np * 4                     # ~4 live f32 (Np,Np) slabs per row
    tb = max(1, min(B, temp_budget // per_row, 128))
    if tb >= 8:
        tb = (tb // 8) * 8                        # sublane-aligned tiles
    Bp = ((B + tb - 1) // tb) * tb

    x_p = jnp.pad(x, ((0, Bp - B), (0, Np - N)))

    # grid-invariant constants, DMA'd once (constant index_map -> resident block)
    ii = jnp.arange(Np)
    tie_lt = (ii[None, :] < ii[:, None]).astype(jnp.float32)           # [i, j]: j < i
    diff_mat = ((ii[:, None] == ii[None, :]).astype(jnp.float32)
                - (ii[:, None] == (ii[None, :] - 1)).astype(jnp.float32))
    const = jnp.stack([tie_lt, diff_mat], axis=0)                      # (2, Np, Np)

    kernel = functools.partial(entmax15_kernel, eps=eps, n_valid=N)
    out = pl.pallas_call(
        kernel,
        out_shape=jax.ShapeDtypeStruct((Bp, Np), x.dtype),
        grid=(Bp // tb,),
        in_specs=[
            pl.BlockSpec((2, Np, Np), lambda i: (0, 0, 0)),   # resident constants
            pl.BlockSpec((tb, Np), lambda i: (i, 0)),
        ],
        out_specs=pl.BlockSpec((tb, Np), lambda i: (i, 0)),
        compiler_params=pltpu.CompilerParams(
            dimension_semantics=("parallel",),
            vmem_limit_bytes=vmem_limit,
        ),
        cost_estimate=pl.CostEstimate(
            flops=int(12 * Bp * Np * Np),
            transcendentals=int(Bp * Np),
            bytes_accessed=int(Bp * Np * x.dtype.itemsize * 2 + 2 * Np * Np * 4),
        ),
    )(const, x_p)
    return out[:B, :N]


def entmax15_ref(x, eps=1e-8):
    """Pure-JAX reference mirroring the PyTorch module."""
    N = x.shape[-1]
    max_val = jnp.max(x, axis=-1, keepdims=True)
    z = (x - max_val) / 2.0
    z_srt = -jnp.sort(-z, axis=-1)
    rho = jnp.arange(1, N + 1, dtype=x.dtype)
    mean = jnp.cumsum(z_srt, axis=-1) / rho
    mean_sq = jnp.cumsum(z_srt ** 2, axis=-1) / rho
    ss = rho * (mean_sq - mean ** 2)
    delta = (1.0 - ss) / rho
    tau = mean - jnp.sqrt(jnp.clip(delta, 0.0, None))
    support_size = jnp.sum((z_srt >= tau).astype(x.dtype), axis=-1)
    safe_idx = (jnp.clip(support_size, 1, N) - 1).astype(jnp.int32)
    tau_star = jnp.take_along_axis(tau, safe_idx[:, None], axis=-1)
    out = jnp.clip(z - tau_star, 0.0, None) ** 2
    return out / (jnp.sum(out, axis=-1, keepdims=True) + eps)


if __name__ == "__main__":
    key = jax.random.PRNGKey(0)
    x = jax.random.normal(key, (8, 32), dtype=jnp.float32)   # (batch=8, hidden=32)

    y = entmax15(x)
    jax.block_until_ready(y)

    y_ref = entmax15_ref(x)
    assert y.shape == x.shape
    assert jnp.allclose(y, y_ref, atol=1e-5, rtol=1e-4), \
        f"max abs diff {float(jnp.max(jnp.abs(y - y_ref)))}"
    # sanity: each row of the entmax distribution sums to ~1
    assert jnp.allclose(jnp.sum(y, axis=-1), 1.0, atol=1e-4)

    print("KERNEL_OK")
</pallas_src>

<mosaic_0001>
module attributes {stable_mosaic.version = 11 : i64} {
  func.func @entmax15_kernel(%arg0: i32, %arg1: memref<2x128x128xf32, #tpu.memory_space<vmem>>, %arg2: memref<8x128xf32, #tpu.memory_space<vmem>>, %arg3: memref<8x128xf32, #tpu.memory_space<vmem>>) attributes {dimension_semantics = [#tpu.dimension_semantics<parallel>], iteration_bounds = array<i64: 1>, scalar_prefetch = 0 : i64, scratch_operands = 0 : i64, tpu.core_type = #tpu.core_type<tc>, window_params = [{pipeline_mode = #tpu.pipeline_mode<synchronous>, transform_indices = @transform_0, window_bounds = array<i64: 2, 128, 128>}, {transform_indices = @transform_1, window_bounds = array<i64: 8, 128>}, {transform_indices = @transform_2, window_bounds = array<i64: 8, 128>}]} {
    %c0 = arith.constant 0 : index
    %c0_0 = arith.constant 0 : index
    %0 = vector.load %arg2[%c0, %c0_0] : memref<8x128xf32, #tpu.memory_space<vmem>>, vector<8x128xf32>
    %1 = tpu.iota {dimensions = array<i32: 1>} : vector<1x128xi32>
    %c32_i32 = arith.constant 32 : i32
    %2 = vector.broadcast %c32_i32 : i32 to vector<1x128xi32>
    %3 = arith.cmpi slt, %1, %2 : vector<1x128xi32>
    %4 = arith.sitofp %1 : vector<1x128xi32> to vector<1x128xf32>
    %cst = arith.constant 0xFF800000 : f32
    %5 = vector.shape_cast %3 : vector<1x128xi1> to vector<1x128xi1>
    %6 = vector.broadcast %5 : vector<1x128xi1> to vector<8x128xi1>
    %7 = vector.broadcast %cst : f32 to vector<8x128xf32>
    %8 = arith.select %6, %0, %7 : vector<8x128xi1>, vector<8x128xf32>
    %cst_1 = arith.constant dense<0xFF800000> : vector<8xf32>
    %9 = vector.multi_reduction <maximumf>, %8, %cst_1 [1] : vector<8x128xf32> to vector<8xf32>
    %10 = vector.shape_cast %9 : vector<8xf32> to vector<8x1xf32>
    %11 = vector.broadcast %10 : vector<8x1xf32> to vector<8x128xf32>
    %12 = arith.subf %0, %11 : vector<8x128xf32>
    %cst_2 = arith.constant 5.000000e-01 : f32
    %13 = vector.broadcast %cst_2 : f32 to vector<8x128xf32>
    %14 = arith.mulf %12, %13 : vector<8x128xf32>
    %cst_3 = arith.constant 0xFF800000 : f32
    %15 = vector.shape_cast %3 : vector<1x128xi1> to vector<1x128xi1>
    %16 = vector.broadcast %15 : vector<1x128xi1> to vector<8x128xi1>
    %17 = vector.broadcast %cst_3 : f32 to vector<8x128xf32>
    %18 = arith.select %16, %14, %17 : vector<8x128xi1>, vector<8x128xf32>
    %19 = vector.shape_cast %18 : vector<8x128xf32> to vector<8x128x1xf32>
    %20 = vector.shape_cast %18 : vector<8x128xf32> to vector<8x1x128xf32>
    %c0_4 = arith.constant 0 : index
    %c0_5 = arith.constant 0 : index
    %c0_6 = arith.constant 0 : index
    %21 = vector.load %arg1[%c0_4, %c0_5, %c0_6] : memref<2x128x128xf32, #tpu.memory_space<vmem>>, vector<1x128x128xf32>
    %22 = vector.shape_cast %21 : vector<1x128x128xf32> to vector<128x128xf32>
    %cst_7 = arith.constant 5.000000e-01 : f32
    %23 = vector.broadcast %cst_7 : f32 to vector<128x128xf32>
    %24 = arith.cmpf ogt, %22, %23 : vector<128x128xf32>
    %25 = vector.broadcast %20 : vector<8x1x128xf32> to vector<8x128x128xf32>
    %26 = vector.broadcast %19 : vector<8x128x1xf32> to vector<8x128x128xf32>
    %27 = arith.cmpf ogt, %25, %26 : vector<8x128x128xf32>
    %28 = vector.broadcast %20 : vector<8x1x128xf32> to vector<8x128x128xf32>
    %29 = vector.broadcast %19 : vector<8x128x1xf32> to vector<8x128x128xf32>
    %30 = arith.cmpf oeq, %28, %29 : vector<8x128x128xf32>
    %31 = vector.shape_cast %24 : vector<128x128xi1> to vector<1x128x128xi1>
    %32 = vector.broadcast %31 : vector<1x128x128xi1> to vector<8x128x128xi1>
    %33 = arith.andi %30, %32 : vector<8x128x128xi1>
    %34 = arith.ori %27, %33 : vector<8x128x128xi1>
    %35 = arith.extui %34 : vector<8x128x128xi1> to vector<8x128x128xi32>
    %36 = arith.sitofp %35 : vector<8x128x128xi32> to vector<8x128x128xf32>
    %cst_8 = arith.constant dense<0.000000e+00> : vector<8x128xf32>
    %37 = vector.multi_reduction <add>, %36, %cst_8 [2] : vector<8x128x128xf32> to vector<8x128xf32>
    %38 = vector.shape_cast %37 : vector<8x128xf32> to vector<8x128x1xf32>
    %39 = vector.shape_cast %4 : vector<1x128xf32> to vector<1x1x128xf32>
    %40 = vector.broadcast %38 : vector<8x128x1xf32> to vector<8x128x128xf32>
    %41 = vector.broadcast %39 : vector<1x1x128xf32> to vector<8x128x128xf32>
    %42 = arith.cmpf ole, %40, %41 : vector<8x128x128xf32>
    %43 = arith.extui %42 : vector<8x128x128xi1> to vector<8x128x128xi32>
    %44 = arith.sitofp %43 : vector<8x128x128xi32> to vector<8x128x128xf32>
    %cst_9 = arith.constant 0.000000e+00 : f32
    %45 = vector.shape_cast %3 : vector<1x128xi1> to vector<1x128xi1>
    %46 = vector.broadcast %45 : vector<1x128xi1> to vector<8x128xi1>
    %47 = vector.broadcast %cst_9 : f32 to vector<8x128xf32>
    %48 = arith.select %46, %18, %47 : vector<8x128xi1>, vector<8x128xf32>
    %49 = tpu.iota {dimensions = array<i32: 1>} : vector<1x2x1xi32>
    %c0_i32 = arith.constant 0 : i32
    %50 = vector.broadcast %c0_i32 : i32 to vector<1x2x1xi32>
    %51 = arith.cmpi eq, %49, %50 : vector<1x2x1xi32>
    %52 = vector.shape_cast %48 : vector<8x128xf32> to vector<8x1x128xf32>
    %53 = arith.mulf %48, %48 : vector<8x128xf32>
    %54 = vector.shape_cast %53 : vector<8x128xf32> to vector<8x1x128xf32>
    %55 = vector.shape_cast %51 : vector<1x2x1xi1> to vector<1x2x1xi1>
    %56 = vector.broadcast %55 : vector<1x2x1xi1> to vector<8x2x128xi1>
    %57 = vector.shape_cast %52 : vector<8x1x128xf32> to vector<8x1x128xf32>
    %58 = vector.broadcast %57 : vector<8x1x128xf32> to vector<8x2x128xf32>
    %59 = vector.shape_cast %54 : vector<8x1x128xf32> to vector<8x1x128xf32>
    %60 = vector.broadcast %59 : vector<8x1x128xf32> to vector<8x2x128xf32>
    %61 = arith.select %56, %58, %60 : vector<8x2x128xi1>, vector<8x2x128xf32>
    "tpu.trace_start"() <{level = 10 : i32, message = "bci,bir->bcr"}> : () -> ()
    %cst_10 = arith.constant dense<0.000000e+00> : vector<8x2x128xf32>
    %62 = tpu.matmul %61, %44, %cst_10 {dimension_numbers = #tpu.dot_dimension_numbers<[2], [1], [1], [2], [0, 0, 0, 1, 1, 2], [0], [0]>} : vector<8x2x128xf32>, vector<8x128x128xf32>, vector<8x2x128xf32> -> vector<8x2x128xf32>
    "tpu.trace_stop"() : () -> ()
    %63 = vector.extract_strided_slice %62 {offsets = [0, 0, 0], sizes = [8, 1, 128], strides = [1, 1, 1]} : vector<8x2x128xf32> to vector<8x1x128xf32>
    %64 = vector.shape_cast %63 : vector<8x1x128xf32> to vector<8x128xf32>
    %65 = vector.extract_strided_slice %62 {offsets = [0, 1, 0], sizes = [8, 1, 128], strides = [1, 1, 1]} : vector<8x2x128xf32> to vector<8x1x128xf32>
    %66 = vector.shape_cast %65 : vector<8x1x128xf32> to vector<8x128xf32>
    %cst_11 = arith.constant 1.000000e+00 : f32
    %67 = vector.broadcast %cst_11 : f32 to vector<1x128xf32>
    %68 = arith.addf %4, %67 : vector<1x128xf32>
    %69 = vector.broadcast %68 : vector<1x128xf32> to vector<8x128xf32>
    %70 = arith.divf %64, %69 : vector<8x128xf32>
    %71 = vector.broadcast %68 : vector<1x128xf32> to vector<8x128xf32>
    %72 = arith.divf %66, %71 : vector<8x128xf32>
    %73 = arith.mulf %70, %70 : vector<8x128xf32>
    %74 = arith.subf %72, %73 : vector<8x128xf32>
    %75 = vector.broadcast %68 : vector<1x128xf32> to vector<8x128xf32>
    %76 = arith.mulf %75, %74 : vector<8x128xf32>
    %cst_12 = arith.constant 1.000000e+00 : f32
    %77 = vector.broadcast %cst_12 : f32 to vector<8x128xf32>
    %78 = arith.subf %77, %76 : vector<8x128xf32>
    %79 = vector.broadcast %68 : vector<1x128xf32> to vector<8x128xf32>
    %80 = arith.divf %78, %79 : vector<8x128xf32>
    %cst_13 = arith.constant 0.000000e+00 : f32
    %81 = vector.broadcast %cst_13 : f32 to vector<8x128xf32>
    %82 = arith.maximumf %80, %81 : vector<8x128xf32>
    %83 = math.sqrt %82 : vector<8x128xf32>
    %84 = arith.subf %70, %83 : vector<8x128xf32>
    %c1 = arith.constant 1 : index
    %c0_14 = arith.constant 0 : index
    %c0_15 = arith.constant 0 : index
    %85 = vector.load %arg1[%c1, %c0_14, %c0_15] : memref<2x128x128xf32, #tpu.memory_space<vmem>>, vector<1x128x128xf32>
    %86 = vector.shape_cast %85 : vector<1x128x128xf32> to vector<128x128xf32>
    %cst_16 = arith.constant dense<0.000000e+00> : vector<8x128xf32>
    %87 = tpu.matmul %64, %86, %cst_16 {dimension_numbers = #tpu.dot_dimension_numbers<[1], [0], [0], [1], [0, 0, 1, 1], [], []>} : vector<8x128xf32>, vector<128x128xf32>, vector<8x128xf32> -> vector<8x128xf32>
    %88 = arith.cmpf oge, %87, %84 : vector<8x128xf32>
    %89 = vector.broadcast %3 : vector<1x128xi1> to vector<8x128xi1>
    %90 = arith.andi %88, %89 : vector<8x128xi1>
    %91 = arith.extui %90 : vector<8x128xi1> to vector<8x128xi32>
    %92 = arith.sitofp %91 : vector<8x128xi32> to vector<8x128xf32>
    %cst_17 = arith.constant dense<0.000000e+00> : vector<8xf32>
    %93 = vector.multi_reduction <add>, %92, %cst_17 [1] : vector<8x128xf32> to vector<8xf32>
    %94 = vector.shape_cast %93 : vector<8xf32> to vector<8x1xf32>
    %cst_18 = arith.constant 1.000000e+00 : f32
    %cst_19 = arith.constant 3.200000e+01 : f32
    %95 = vector.broadcast %cst_18 : f32 to vector<8x1xf32>
    %96 = arith.maximumf %95, %94 : vector<8x1xf32>
    %97 = vector.broadcast %cst_19 : f32 to vector<8x1xf32>
    %98 = arith.minimumf %97, %96 : vector<8x1xf32>
    %cst_20 = arith.constant 1.000000e+00 : f32
    %99 = vector.broadcast %cst_20 : f32 to vector<8x1xf32>
    %100 = arith.subf %98, %99 : vector<8x1xf32>
    %101 = vector.broadcast %4 : vector<1x128xf32> to vector<8x128xf32>
    %102 = vector.broadcast %100 : vector<8x1xf32> to vector<8x128xf32>
    %103 = arith.cmpf oeq, %101, %102 : vector<8x128xf32>
    %104 = arith.extui %103 : vector<8x128xi1> to vector<8x128xi32>
    %105 = arith.sitofp %104 : vector<8x128xi32> to vector<8x128xf32>
    %106 = arith.mulf %84, %105 : vector<8x128xf32>
    %cst_21 = arith.constant dense<0.000000e+00> : vector<8xf32>
    %107 = vector.multi_reduction <add>, %106, %cst_21 [1] : vector<8x128xf32> to vector<8xf32>
    %108 = vector.shape_cast %107 : vector<8xf32> to vector<8x1xf32>
    %109 = vector.broadcast %108 : vector<8x1xf32> to vector<8x128xf32>
    %110 = arith.subf %18, %109 : vector<8x128xf32>
    %cst_22 = arith.constant 0.000000e+00 : f32
    %111 = vector.broadcast %cst_22 : f32 to vector<8x128xf32>
    %112 = arith.maximumf %110, %111 : vector<8x128xf32>
    %113 = arith.mulf %112, %112 : vector<8x128xf32>
    %cst_23 = arith.constant dense<0.000000e+00> : vector<8xf32>
    %114 = vector.multi_reduction <add>, %113, %cst_23 [1] : vector<8x128xf32> to vector<8xf32>
    %115 = vector.shape_cast %114 : vector<8xf32> to vector<8x1xf32>
    %cst_24 = arith.constant 9.99999993E-9 : f32
    %116 = vector.broadcast %cst_24 : f32 to vector<8x1xf32>
    %117 = arith.addf %115, %116 : vector<8x1xf32>
    %118 = vector.broadcast %117 : vector<8x1xf32> to vector<8x128xf32>
    %119 = arith.divf %113, %118 : vector<8x128xf32>
    %c0_25 = arith.constant 0 : index
    %c0_26 = arith.constant 0 : index
    %120 = vector.load %arg3[%c0_25, %c0_26] : memref<8x128xf32, #tpu.memory_space<vmem>>, vector<8x128xf32>
    tpu.vector_store %arg3[%c0_25, %c0_26], %119 {strides = array<i32>} : memref<8x128xf32, #tpu.memory_space<vmem>>, vector<8x128xf32>,
    return
  }
  func.func @transform_0(%arg0: i32) -> (i32, i32, i32) {
    %c0_i32 = arith.constant 0 : i32
    %c0_i32_0 = arith.constant 0 : i32
    %c0_i32_1 = arith.constant 0 : i32
    %c0_i32_2 = arith.constant 0 : i32
    return %c0_i32, %c0_i32_0, %c0_i32_1 : i32, i32, i32
  }
  func.func @transform_1(%arg0: i32) -> (i32, i32) {
    %c0_i32 = arith.constant 0 : i32
    %c0_i32_0 = arith.constant 0 : i32
    return %arg0, %c0_i32 : i32, i32
  }
  func.func @transform_2(%arg0: i32) -> (i32, i32) {
    %c0_i32 = arith.constant 0 : i32
    %c0_i32_0 = arith.constant 0 : i32
    return %arg0, %c0_i32 : i32, i32
  }
}

</mosaic_0001>

<llo_original>
// kernel: tpu_custom_call.1
$region0: #{tpu_custom_call.1}
  #allocation0 [shape = 'u32[]', space=smem, size = 0x4, offset = 0x4, fixed_abs, tag = 'smem constant byte address 0x4 - core index']
  #allocation1 [shape = 'u32[144,128]{1,0:T(1,128)}', space=vmem, size = 0x12000, scoped, tag = 'internal scratch']
  %s0 = inlined_call_operand.hbm [shape: f32[2,128,128], index: 0, kind: input, shape index: {}]
  %s1 = inlined_call_operand.hbm [shape: f32[8,128], index: 1, kind: input, shape index: {}]
  %s2 = inlined_call_operand.hbm [shape: f32[8,128], index: 2, kind: output, shape index: {}]
  %s3 = sld [smem:[#allocation0]]
  $region26: #{tpu_custom_call.1} parent=0
    _
  %s5 = ssub.s32 1, %s3
  %s6 = scalar_select 0, %s5, %s3
  $region1: #{tpu_custom_call.1} parent=0
    #allocation2 [shape = 'u8[131072]{0}', space=vmem, size = 0x20000, scoped, tag = 'input window, operand 0, single buffered']
    #allocation3 [shape = 's32[1]{0}', space=sflag, size = 0x4, scoped, tag = 'scoped memory for tpu_custom_call.1']
    #allocation4 [shape = 's32[1]{0}', space=sflag, size = 0x4, scoped, tag = 'scoped memory for tpu_custom_call.1']
    #allocation5 [shape = 'u8[4096]{0}', space=vmem, size = 0x1000, scoped, tag = 'input window, operand 1, single buffered']
    #allocation6 [shape = 's32[1]{0}', space=sflag, size = 0x4, scoped, tag = 'scoped memory for tpu_custom_call.1']
    #allocation7 [shape = 'u8[4096]{0}', space=vmem, size = 0x1000, scoped, tag = 'output window, operand 0, single buffered']
    %7 = vsyncpa [#allocation3], 0
    %8 = vsyncpa [#allocation6], 0
    %9 = vsyncpa [#allocation4], 0
    // Predicated region
    $region2: #{tpu_custom_call.1} parent=1 // pred_check
      _
    $region3: #{tpu_custom_call.1} parent=1 // pred_check_branch
      %11 = sbr.rel (0) target = $region5
    $region4: #{tpu_custom_call.1} parent=1 // pred_region
      %s13 = ssub.s32 4096, 4096
      %14 = vsyncadd [#allocation3], %s13
      %s15 = sshll.u32 [#allocation2], 4
      %s16 = int_to_ptr.vmem [resolvable:$true] %s15
      %21 = dma.hbm_to_vmem [thread:$0]  %s0, 4096, %s16, [#allocation3], 128, 128, 8
    $region5: #{tpu_custom_call.1} parent=1 // pred_fallthru
      _
    // Predicated region
    $region6: #{tpu_custom_call.1} parent=1 // pred_check
      _
    $region7: #{tpu_custom_call.1} parent=1 // pred_check_branch
      %23 = sbr.rel (0) target = $region9
    $region8: #{tpu_custom_call.1} parent=1 // pred_region
      %s25 = ssub.s32 128, 128
      %26 = vsyncadd [#allocation6], %s25
      %s28 = sshll.u32 [#allocation5], 4
      %s29 = int_to_ptr.vmem [resolvable:$true] %s28
      %31 = dma.hbm_to_vmem [thread:$0]  %s1, 128, %s29, [#allocation6]
    $region9: #{tpu_custom_call.1} parent=1 // pred_fallthru
      _
    // Predicated region
    $region10: #{tpu_custom_call.1} parent=1 // pred_check
      _
    $region11: #{tpu_custom_call.1} parent=1 // pred_check_branch
      %33 = sbr.rel (0) target = $region13
    $region12: #{tpu_custom_call.1} parent=1 // pred_region
      %34 = dma.done [#allocation3], 4096
    $region13: #{tpu_custom_call.1} parent=1 // pred_fallthru
      _
    // Predicated region
    $region14: #{tpu_custom_call.1} parent=1 // pred_check
      _
    $region15: #{tpu_custom_call.1} parent=1 // pred_check_branch
      %36 = sbr.rel (0) target = $region17
    $region16: #{tpu_custom_call.1} parent=1 // pred_region
      %37 = dma.done [#allocation6], 128
    $region17: #{tpu_custom_call.1} parent=1 // pred_fallthru
      _
    %v38 = vld [vmem:[#allocation5] sm:$0xff]
    %v39 = vlaneseq
    %v40 = vand.u32 %v39, 127
    %vm41 = vcmp.lt.s32.totalorder %v40, 32
    %v42 = vcvt.s32.f32 %v40
    %v43 = vsel %vm41, 1, 0
    %vm44 = vcmp.eq.s32.totalorder %v43, 1
    %v45 = vsel %vm44, %v38, -inf
    %46 = vmax.xlane.f32.xlu0 %v45
    %v47 = vpop.xlane.xlu0 %46
    %v48 = vsub.f32 %v38, %v47
    %v49 = vmul.f32 %v48, 0.5
    %v50 = vsel %vm44, %v49, -inf
    %v51 = vlaneseq
    %v52 = vshrl.u32 %v51, 7
    %v53 = vsub.s32 0, %v52
    %v54 = vrot.slane %v50, %v53
    %56 = vbcast.lane.b32.xlu0 %v54, 256
    %v57 = vpop.permute.xlu0 %56
    %s59 = sor.u32 256, 8
    %60 = vbcast.lane.b32.xlu0 %v54, %s59
    %v61 = vpop.permute.xlu0 %60
    %s63 = sor.u32 256, 16
    %64 = vbcast.lane.b32.xlu0 %v54, %s63
    %v65 = vpop.permute.xlu0 %64
    %s67 = sor.u32 256, 24
    %68 = vbcast.lane.b32.xlu0 %v54, %s67
    %v69 = vpop.permute.xlu0 %68
    %s71 = sor.u32 256, 32
    %72 = vbcast.lane.b32.xlu0 %v54, %s71
    %v73 = vpop.permute.xlu0 %72
    %s75 = sor.u32 256, 40
    %76 = vbcast.lane.b32.xlu0 %v54, %s75
    %v77 = vpop.permute.xlu0 %76
    %s79 = sor.u32 256, 48
    %80 = vbcast.lane.b32.xlu0 %v54, %s79
    %v81 = vpop.permute.xlu0 %80
    %s83 = sor.u32 256, 56
    %84 = vbcast.lane.b32.xlu0 %v54, %s83
    %v85 = vpop.permute.xlu0 %84
    %s87 = sor.u32 256, 64
    %88 = vbcast.lane.b32.xlu0 %v54, %s87
    %v89 = vpop.permute.xlu0 %88
    %s91 = sor.u32 256, 72
    %92 = vbcast.lane.b32.xlu0 %v54, %s91
    %v93 = vpop.permute.xlu0 %92
    %s95 = sor.u32 256, 80
    %96 = vbcast.lane.b32.xlu0 %v54, %s95
    %v97 = vpop.permute.xlu0 %96
    %s99 = sor.u32 256, 88
    %100 = vbcast.lane.b32.xlu0 %v54, %s99
    %v101 = vpop.permute.xlu0 %100
    %s103 = sor.u32 256, 96
    %104 = vbcast.lane.b32.xlu0 %v54, %s103
    %v105 = vpop.permute.xlu0 %104
    %s107 = sor.u32 256, 104
    %108 = vbcast.lane.b32.xlu0 %v54, %s107
    %v109 = vpop.permute.xlu0 %108
    %s111 = sor.u32 256, 112
    %112 = vbcast.lane.b32.xlu0 %v54, %s111
    %v113 = vpop.permute.xlu0 %112
    %s115 = sor.u32 256, 120
    %116 = vbcast.lane.b32.xlu0 %v54, %s115
    %v117 = vpop.permute.xlu0 %116
    %v118 = vlaneseq
    %v119 = vshrl.u32 %v118, 7
    %v120 = vsub.s32 1, %v119
    %v121 = vrot.slane %v50, %v120
    %123 = vbcast.lane.b32.xlu0 %v121, 256
    %v124 = vpop.permute.xlu0 %123
    %s126 = sor.u32 256, 8
    %127 = vbcast.lane.b32.xlu0 %v121, %s126
    %v128 = vpop.permute.xlu0 %127
    %s130 = sor.u32 256, 16
    %131 = vbcast.lane.b32.xlu0 %v121, %s130
    %v132 = vpop.permute.xlu0 %131
    %s134 = sor.u32 256, 24
    %135 = vbcast.lane.b32.xlu0 %v121, %s134
    %v136 = vpop.permute.xlu0 %135
    %s138 = sor.u32 256, 32
    %139 = vbcast.lane.b32.xlu0 %v121, %s138
    %v140 = vpop.permute.xlu0 %139
    %s142 = sor.u32 256, 40
    %143 = vbcast.lane.b32.xlu0 %v121, %s142
    %v144 = vpop.permute.xlu0 %143
    %s146 = sor.u32 256, 48
    %147 = vbcast.lane.b32.xlu0 %v121, %s146
    %v148 = vpop.permute.xlu0 %147
    %s150 = sor.u32 256, 56
    %151 = vbcast.lane.b32.xlu0 %v121, %s150
    %v152 = vpop.permute.xlu0 %151
    %s154 = sor.u32 256, 64
    %155 = vbcast.lane.b32.xlu0 %v121, %s154
    %v156 = vpop.permute.xlu0 %155
    %s158 = sor.u32 256, 72
    %159 = vbcast.lane.b32.xlu0 %v121, %s158
    %v160 = vpop.permute.xlu0 %159
    %s162 = sor.u32 256, 80
    %163 = vbcast.lane.b32.xlu0 %v121, %s162
    %v164 = vpop.permute.xlu0 %163
    %s166 = sor.u32 256, 88
    %167 = vbcast.lane.b32.xlu0 %v121, %s166
    %v168 = vpop.permute.xlu0 %167
    %s170 = sor.u32 256, 96
    %171 = vbcast.lane.b32.xlu0 %v121, %s170
    %v172 = vpop.permute.xlu0 %171
    %s174 = sor.u32 256, 104
    %175 = vbcast.lane.b32.xlu0 %v121, %s174
    %v176 = vpop.permute.xlu0 %175
    %s178 = sor.u32 256, 112
    %179 = vbcast.lane.b32.xlu0 %v121, %s178
    %v180 = vpop.permute.xlu0 %179
    %s182 = sor.u32 256, 120
    %183 = vbcast.lane.b32.xlu0 %v121, %s182
    %v184 = vpop.permute.xlu0 %183
    %v185 = vlaneseq
    %v186 = vshrl.u32 %v185, 7
    %v187 = vsub.s32 2, %v186
    %v188 = vrot.slane %v50, %v187
    %190 = vbcast.lane.b32.xlu0 %v188, 256
    %v191 = vpop.permute.xlu0 %190
    %s193 = sor.u32 256, 8
    %194 = vbcast.lane.b32.xlu0 %v188, %s193
    %v195 = vpop.permute.xlu0 %194
    %s197 = sor.u32 256, 16
    %198 = vbcast.lane.b32.xlu0 %v188, %s197
    %v199 = vpop.permute.xlu0 %198
    %s201 = sor.u32 256, 24
    %202 = vbcast.lane.b32.xlu0 %v188, %s201
    %v203 = vpop.permute.xlu0 %202
    %s205 = sor.u32 256, 32
    %206 = vbcast.lane.b32.xlu0 %v188, %s205
    %v207 = vpop.permute.xlu0 %206
    %s209 = sor.u32 256, 40
    %210 = vbcast.lane.b32.xlu0 %v188, %s209
    %v211 = vpop.permute.xlu0 %210
    %s213 = sor.u32 256, 48
    %214 = vbcast.lane.b32.xlu0 %v188, %s213
    %v215 = vpop.permute.xlu0 %214
    %s217 = sor.u32 256, 56
    %218 = vbcast.lane.b32.xlu0 %v188, %s217
    %v219 = vpop.permute.xlu0 %218
    %s221 = sor.u32 256, 64
    %222 = vbcast.lane.b32.xlu0 %v188, %s221
    %v223 = vpop.permute.xlu0 %222
    %s225 = sor.u32 256, 72
    %226 = vbcast.lane.b32.xlu0 %v188, %s225
    %v227 = vpop.permute.xlu0 %226
    %s229 = sor.u32 256, 80
    %230 = vbcast.lane.b32.xlu0 %v188, %s229
    %v231 = vpop.permute.xlu0 %230
    %s233 = sor.u32 256, 88
    %234 = vbcast.lane.b32.xlu0 %v188, %s233
    %v235 = vpop.permute.xlu0 %234
    %s237 = sor.u32 256, 96
    %238 = vbcast.lane.b32.xlu0 %v188, %s237
    %v239 = vpop.permute.xlu0 %238
    %s241 = sor.u32 256, 104
    %242 = vbcast.lane.b32.xlu0 %v188, %s241
    %v243 = vpop.permute.xlu0 %242
    %s245 = sor.u32 256, 112
    %246 = vbcast.lane.b32.xlu0 %v188, %s245
    %v247 = vpop.permute.xlu0 %246
    %s249 = sor.u32 256, 120
    %250 = vbcast.lane.b32.xlu0 %v188, %s249
    %v251 = vpop.permute.xlu0 %250
    %v252 = vlaneseq
    %v253 = vshrl.u32 %v252, 7
    %v254 = vsub.s32 3, %v253
    %v255 = vrot.slane %v50, %v254
    %257 = vbcast.lane.b32.xlu0 %v255, 256
    %v258 = vpop.permute.xlu0 %257
    %s260 = sor.u32 256, 8
    %261 = vbcast.lane.b32.xlu0 %v255, %s260
    %v262 = vpop.permute.xlu0 %261
    %s264 = sor.u32 256, 16
    %265 = vbcast.lane.b32.xlu0 %v255, %s264
    %v266 = vpop.permute.xlu0 %265
    %s268 = sor.u32 256, 24
    %269 = vbcast.lane.b32.xlu0 %v255, %s268
    %v270 = vpop.permute.xlu0 %269
    %s272 = sor.u32 256, 32
    %273 = vbcast.lane.b32.xlu0 %v255, %s272
    %v274 = vpop.permute.xlu0 %273
    %s276 = sor.u32 256, 40
    %277 = vbcast.lane.b32.xlu0 %v255, %s276
    %v278 = vpop.permute.xlu0 %277
    %s280 = sor.u32 256, 48
    %281 = vbcast.lane.b32.xlu0 %v255, %s280
    %v282 = vpop.permute.xlu0 %281
    %s284 = sor.u32 256, 56
    %285 = vbcast.lane.b32.xlu0 %v255, %s284
    %v286 = vpop.permute.xlu0 %285
    %s288 = sor.u32 256, 64
    %289 = vbcast.lane.b32.xlu0 %v255, %s288
    %v290 = vpop.permute.xlu0 %289
    %s292 = sor.u32 256, 72
    %293 = vbcast.lane.b32.xlu0 %v255, %s292
    %v294 = vpop.permute.xlu0 %293
    %s296 = sor.u32 256, 80
    %297 = vbcast.lane.b32.xlu0 %v255, %s296
    %v298 = vpop.permute.xlu0 %297
    %s300 = sor.u32 256, 88
    %301 = vbcast.lane.b32.xlu0 %v255, %s300
    %v302 = vpop.permute.xlu0 %301
    %s304 = sor.u32 256, 96
    %305 = vbcast.lane.b32.xlu0 %v255, %s304
    %v306 = vpop.permute.xlu0 %305
    %s308 = sor.u32 256, 104
    %309 = vbcast.lane.b32.xlu0 %v255, %s308
    %v310 = vpop.permute.xlu0 %309
    %s312 = sor.u32 256, 112
    %313 = vbcast.lane.b32.xlu0 %v255, %s312
    %v314 = vpop.permute.xlu0 %313
    %s316 = sor.u32 256, 120
    %317 = vbcast.lane.b32.xlu0 %v255, %s316
    %v318 = vpop.permute.xlu0 %317
    %v319 = vlaneseq
    %v320 = vshrl.u32 %v319, 7
    %v321 = vsub.s32 4, %v320
    %v322 = vrot.slane %v50, %v321
    %324 = vbcast.lane.b32.xlu0 %v322, 256
    %v325 = vpop.permute.xlu0 %324
    %s327 = sor.u32 256, 8
    %328 = vbcast.lane.b32.xlu0 %v322, %s327
    %v329 = vpop.permute.xlu0 %328
    %s331 = sor.u32 256, 16
    %332 = vbcast.lane.b32.xlu0 %v322, %s331
    %v333 = vpop.permute.xlu0 %332
    %s335 = sor.u32 256, 24
    %336 = vbcast.lane.b32.xlu0 %v322, %s335
    %v337 = vpop.permute.xlu0 %336
    %s339 = sor.u32 256, 32
    %340 = vbcast.lane.b32.xlu0 %v322, %s339
    %v341 = vpop.permute.xlu0 %340
    %s343 = sor.u32 256, 40
    %344 = vbcast.lane.b32.xlu0 %v322, %s343
    %v345 = vpop.permute.xlu0 %344
    %s347 = sor.u32 256, 48
    %348 = vbcast.lane.b32.xlu0 %v322, %s347
    %v349 = vpop.permute.xlu0 %348
    %s351 = sor.u32 256, 56
    %352 = vbcast.lane.b32.xlu0 %v322, %s351
    %v353 = vpop.permute.xlu0 %352
    %s355 = sor.u32 256, 64
    %356 = vbcast.lane.b32.xlu0 %v322, %s355
    %v357 = vpop.permute.xlu0 %356
    %s359 = sor.u32 256, 72
    %360 = vbcast.lane.b32.xlu0 %v322, %s359
    %v361 = vpop.permute.xlu0 %360
    %s363 = sor.u32 256, 80
    %364 = vbcast.lane.b32.xlu0 %v322, %s363
    %v365 = vpop.permute.xlu0 %364
    %s367 = sor.u32 256, 88
    %368 = vbcast.lane.b32.xlu0 %v322, %s367
    %v369 = vpop.permute.xlu0 %368
    %s371 = sor.u32 256, 96
    %372 = vbcast.lane.b32.xlu0 %v322, %s371
    %v373 = vpop.permute.xlu0 %372
    %s375 = sor.u32 256, 104
    %376 = vbcast.lane.b32.xlu0 %v322, %s375
    %v377 = vpop.permute.xlu0 %376
    %s379 = sor.u32 256, 112
    %380 = vbcast.lane.b32.xlu0 %v322, %s379
    %v381 = vpop.permute.xlu0 %380
    %s383 = sor.u32 256, 120
    %384 = vbcast.lane.b32.xlu0 %v322, %s383
    %v385 = vpop.permute.xlu0 %384
    %v386 = vlaneseq
    %v387 = vshrl.u32 %v386, 7
    %v388 = vsub.s32 5, %v387
    %v389 = vrot.slane %v50, %v388
    %391 = vbcast.lane.b32.xlu0 %v389, 256
    %v392 = vpop.permute.xlu0 %391
    %s394 = sor.u32 256, 8
    %395 = vbcast.lane.b32.xlu0 %v389, %s394
    %v396 = vpop.permute.xlu0 %395
    %s398 = sor.u32 256, 16
    %399 = vbcast.lane.b32.xlu0 %v389, %s398
    %v400 = vpop.permute.xlu0 %399
    %s402 = sor.u32 256, 24
    %403 = vbcast.lane.b32.xlu0 %v389, %s402
    %v404 = vpop.permute.xlu0 %403
    %s406 = sor.u32 256, 32
    %407 = vbcast.lane.b32.xlu0 %v389, %s406
    %v408 = vpop.permute.xlu0 %407
    %s410 = sor.u32 256, 40
    %411 = vbcast.lane.b32.xlu0 %v389, %s410
    %v412 = vpop.permute.xlu0 %411
    %s414 = sor.u32 256, 48
    %415 = vbcast.lane.b32.xlu0 %v389, %s414
    %v416 = vpop.permute.xlu0 %415
    %s418 = sor.u32 256, 56
    %419 = vbcast.lane.b32.xlu0 %v389, %s418
    %v420 = vpop.permute.xlu0 %419
    %s422 = sor.u32 256, 64
    %423 = vbcast.lane.b32.xlu0 %v389, %s422
    %v424 = vpop.permute.xlu0 %423
    %s426 = sor.u32 256, 72
    %427 = vbcast.lane.b32.xlu0 %v389, %s426
    %v428 = vpop.permute.xlu0 %427
    %s430 = sor.u32 256, 80
    %431 = vbcast.lane.b32.xlu0 %v389, %s430
    %v432 = vpop.permute.xlu0 %431
    %s434 = sor.u32 256, 88
    %435 = vbcast.lane.b32.xlu0 %v389, %s434
    %v436 = vpop.permute.xlu0 %435
    %s438 = sor.u32 256, 96
    %439 = vbcast.lane.b32.xlu0 %v389, %s438
    %v440 = vpop.permute.xlu0 %439
    %s442 = sor.u32 256, 104
    %443 = vbcast.lane.b32.xlu0 %v389, %s442
    %v444 = vpop.permute.xlu0 %443
    %s446 = sor.u32 256, 112
    %447 = vbcast.lane.b32.xlu0 %v389, %s446
    %v448 = vpop.permute.xlu0 %447
    %s450 = sor.u32 256, 120
    %451 = vbcast.lane.b32.xlu0 %v389, %s450
    %v452 = vpop.permute.xlu0 %451
    %v453 = vlaneseq
    %v454 = vshrl.u32 %v453, 7
    %v455 = vsub.s32 6, %v454
    %v456 = vrot.slane %v50, %v455
    %458 = vbcast.lane.b32.xlu0 %v456, 256
    %v459 = vpop.permute.xlu0 %458
    %s461 = sor.u32 256, 8
    %462 = vbcast.lane.b32.xlu0 %v456, %s461
    %v463 = vpop.permute.xlu0 %462
    %s465 = sor.u32 256, 16
    %466 = vbcast.lane.b32.xlu0 %v456, %s465
    %v467 = vpop.permute.xlu0 %466
    %s469 = sor.u32 256, 24
    %470 = vbcast.lane.b32.xlu0 %v456, %s469
    %v471 = vpop.permute.xlu0 %470
    %s473 = sor.u32 256, 32
    %474 = vbcast.lane.b32.xlu0 %v456, %s473
    %v475 = vpop.permute.xlu0 %474
    %s477 = sor.u32 256, 40
    %478 = vbcast.lane.b32.xlu0 %v456, %s477
    %v479 = vpop.permute.xlu0 %478
    %s481 = sor.u32 256, 48
    %482 = vbcast.lane.b32.xlu0 %v456, %s481
    %v483 = vpop.permute.xlu0 %482
    %s485 = sor.u32 256, 56
    %486 = vbcast.lane.b32.xlu0 %v456, %s485
    %v487 = vpop.permute.xlu0 %486
    %s489 = sor.u32 256, 64
    %490 = vbcast.lane.b32.xlu0 %v456, %s489
    %v491 = vpop.permute.xlu0 %490
    %s493 = sor.u32 256, 72
    %494 = vbcast.lane.b32.xlu0 %v456, %s493
    %v495 = vpop.permute.xlu0 %494
    %s497 = sor.u32 256, 80
    %498 = vbcast.lane.b32.xlu0 %v456, %s497
    %v499 = vpop.permute.xlu0 %498
    %s501 = sor.u32 256, 88
    %502 = vbcast.lane.b32.xlu0 %v456, %s501
    %v503 = vpop.permute.xlu0 %502
    %s505 = sor.u32 256, 96
    %506 = vbcast.lane.b32.xlu0 %v456, %s505
    %v507 = vpop.permute.xlu0 %506
    %s509 = sor.u32 256, 104
    %510 = vbcast.lane.b32.xlu0 %v456, %s509
    %v511 = vpop.permute.xlu0 %510
    %s513 = sor.u32 256, 112
    %514 = vbcast.lane.b32.xlu0 %v456, %s513
    %v515 = vpop.permute.xlu0 %514
    %s517 = sor.u32 256, 120
    %518 = vbcast.lane.b32.xlu0 %v456, %s517
    %v519 = vpop.permute.xlu0 %518
    %v520 = vlaneseq
    %v521 = vshrl.u32 %v520, 7
    %v522 = vsub.s32 7, %v521
    %v523 = vrot.slane %v50, %v522
    %525 = vbcast.lane.b32.xlu0 %v523, 256
    %v526 = vpop.permute.xlu0 %525
    %s528 = sor.u32 256, 8
    %529 = vbcast.lane.b32.xlu0 %v523, %s528
    %v530 = vpop.permute.xlu0 %529
    %s532 = sor.u32 256, 16
    %533 = vbcast.lane.b32.xlu0 %v523, %s532
    %v534 = vpop.permute.xlu0 %533
    %s536 = sor.u32 256, 24
    %537 = vbcast.lane.b32.xlu0 %v523, %s536
    %v538 = vpop.permute.xlu0 %537
    %s540 = sor.u32 256, 32
    %541 = vbcast.lane.b32.xlu0 %v523, %s540
    %v542 = vpop.permute.xlu0 %541
    %s544 = sor.u32 256, 40
    %545 = vbcast.lane.b32.xlu0 %v523, %s544
    %v546 = vpop.permute.xlu0 %545
    %s548 = sor.u32 256, 48
    %549 = vbcast.lane.b32.xlu0 %v523, %s548
    %v550 = vpop.permute.xlu0 %549
    %s552 = sor.u32 256, 56
    %553 = vbcast.lane.b32.xlu0 %v523, %s552
    %v554 = vpop.permute.xlu0 %553
    %s556 = sor.u32 256, 64
    %557 = vbcast.lane.b32.xlu0 %v523, %s556
    %v558 = vpop.permute.xlu0 %557
    %s560 = sor.u32 256, 72
    %561 = vbcast.lane.b32.xlu0 %v523, %s560
    %v562 = vpop.permute.xlu0 %561
    %s564 = sor.u32 256, 80
    %565 = vbcast.lane.b32.xlu0 %v523, %s564
    %v566 = vpop.permute.xlu0 %565
    %s568 = sor.u32 256, 88
    %569 = vbcast.lane.b32.xlu0 %v523, %s568
    %v570 = vpop.permute.xlu0 %569
    %s572 = sor.u32 256, 96
    %573 = vbcast.lane.b32.xlu0 %v523, %s572
    %v574 = vpop.permute.xlu0 %573
    %s576 = sor.u32 256, 104
    %577 = vbcast.lane.b32.xlu0 %v523, %s576
    %v578 = vpop.permute.xlu0 %577
    %s580 = sor.u32 256, 112
    %581 = vbcast.lane.b32.xlu0 %v523, %s580
    %v582 = vpop.permute.xlu0 %581
    %s584 = sor.u32 256, 120
    %585 = vbcast.lane.b32.xlu0 %v523, %s584
    %v586 = vpop.permute.xlu0 %585
    %v588 = vcombine.high %v50, %v50
    %v590 = vunpack.c.l.s4 1966171168
    %v591 = vunpack.c.0.s8 %v590
    %v592 = vlaneseq
    %v593 = vshrl.u32 %v592, 7
    %v594 = vsub.s32 %v591, %v593
    %v595 = vrot.slane %v50, %v594
    %v597 = vunpack.c.l.s4 1966171168
    %v598 = vunpack.c.0.s8 %v597
    %v599 = vlaneseq
    %v600 = vshrl.u32 %v599, 7
    %v601 = vsub.s32 %v598, %v600
    %v602 = vrot.slane %v588, %v601
    %v603 = vcombine.high %v595, %v595
    %v604 = vcombine.high %v602, %v602
    %v606 = vunpack.c.l.s4 1966171168
    %v607 = vunpack.c.0.s8 %v606
    %v608 = vlaneseq
    %v609 = vshrl.u32 %v608, 7
    %v610 = vsub.s32 %v607, %v609
    %v611 = vrot.slane %v595, %v610
    %v613 = vunpack.c.l.s4 1966171168
    %v614 = vunpack.c.0.s8 %v613
    %v615 = vlaneseq
    %v616 = vshrl.u32 %v615, 7
    %v617 = vsub.s32 %v614, %v616
    %v618 = vrot.slane %v602, %v617
    %v620 = vunpack.c.l.s4 1966171168
    %v621 = vunpack.c.0.s8 %v620
    %v622 = vlaneseq
    %v623 = vshrl.u32 %v622, 7
    %v624 = vsub.s32 %v621, %v623
    %v625 = vrot.slane %v603, %v624
    %v627 = vunpack.c.l.s4 1966171168
    %v628 = vunpack.c.0.s8 %v627
    %v629 = vlaneseq
    %v630 = vshrl.u32 %v629, 7
    %v631 = vsub.s32 %v628, %v630
    %v632 = vrot.slane %v604, %v631
    %v633 = vcombine.high %v611, %v611
    %v634 = vcombine.high %v618, %v618
    %v635 = vcombine.high %v625, %v625
    %v636 = vcombine.high %v632, %v632
    %v637 = vld [vmem:[#allocation2] sm:$0xff]
    %v638 = vld [vmem:[#allocation2 + $0x8] sm:$0xff]
    %v639 = vld [vmem:[#allocation2 + $0x10] sm:$0xff]
    %v640 = vld [vmem:[#allocation2 + $0x18] sm:$0xff]
    %v641 = vld [vmem:[#allocation2 + $0x20] sm:$0xff]
    %v642 = vld [vmem:[#allocation2 + $0x28] sm:$0xff]
    %v643 = vld [vmem:[#allocation2 + $0x30] sm:$0xff]
    %v644 = vld [vmem:[#allocation2 + $0x38] sm:$0xff]
    %v645 = vld [vmem:[#allocation2 + $0x40] sm:$0xff]
    %v646 = vld [vmem:[#allocation2 + $0x48] sm:$0xff]
    %v647 = vld [vmem:[#allocation2 + $0x50] sm:$0xff]
    %v648 = vld [vmem:[#allocation2 + $0x58] sm:$0xff]
    %v649 = vld [vmem:[#allocation2 + $0x60] sm:$0xff]
    %v650 = vld [vmem:[#allocation2 + $0x68] sm:$0xff]
    %v651 = vld [vmem:[#allocation2 + $0x70] sm:$0xff]
    %v652 = vld [vmem:[#allocation2 + $0x78] sm:$0xff]
    %vm653 = vcmp.gt.f32.partialorder %v637, 0.5
    %vm654 = vcmp.gt.f32.partialorder %v638, 0.5
    %vm655 = vcmp.gt.f32.partialorder %v639, 0.5
    %vm656 = vcmp.gt.f32.partialorder %v640, 0.5
    %vm657 = vcmp.gt.f32.partialorder %v641, 0.5
    %vm658 = vcmp.gt.f32.partialorder %v642, 0.5
    %vm659 = vcmp.gt.f32.partialorder %v643, 0.5
    %vm660 = vcmp.gt.f32.partialorder %v644, 0.5
    %vm661 = vcmp.gt.f32.partialorder %v645, 0.5
    %vm662 = vcmp.gt.f32.partialorder %v646, 0.5
    %vm663 = vcmp.gt.f32.partialorder %v647, 0.5
    %vm664 = vcmp.gt.f32.partialorder %v648, 0.5
    %vm665 = vcmp.gt.f32.partialorder %v649, 0.5
    %vm666 = vcmp.gt.f32.partialorder %v650, 0.5
    %vm667 = vcmp.gt.f32.partialorder %v651, 0.5
    %vm668 = vcmp.gt.f32.partialorder %v652, 0.5
    %v669 = vlaneseq
    %v670 = vshrl.u32 %v669, 7
    %v671 = vsub.s32 0, %v670
    %v672 = vrot.slane %v611, %v671
    %v673 = vlaneseq
    %v674 = vshrl.u32 %v673, 7
    %v675 = vsub.s32 0, %v674
    %v676 = vrot.slane %v625, %v675
    %v677 = vlaneseq
    %v678 = vshrl.u32 %v677, 7
    %v679 = vsub.s32 0, %v678
    %v680 = vrot.slane %v633, %v679
    %v681 = vlaneseq
    %v682 = vshrl.u32 %v681, 7
    %v683 = vsub.s32 0, %v682
    %v684 = vrot.slane %v635, %v683
    %v685 = vlaneseq
    %v686 = vshrl.u32 %v685, 7
    %v687 = vsub.s32 0, %v686
    %v688 = vrot.slane %v618, %v687
    %v689 = vlaneseq
    %v690 = vshrl.u32 %v689, 7
    %v691 = vsub.s32 0, %v690
    %v692 = vrot.slane %v632, %v691
    %v693 = vlaneseq
    %v694 = vshrl.u32 %v693, 7
    %v695 = vsub.s32 0, %v694
    %v696 = vrot.slane %v634, %v695
    %v697 = vlaneseq
    %v698 = vshrl.u32 %v697, 7
    %v699 = vsub.s32 0, %v698
    %v700 = vrot.slane %v636, %v699
    %vm709 = vcmp.gt.f32.partialorder %v672, %v57
    %vm710 = vcmp.gt.f32.partialorder %v672, %v61
    %vm711 = vcmp.gt.f32.partialorder %v672, %v65
    %vm712 = vcmp.gt.f32.partialorder %v672, %v69
    %vm713 = vcmp.gt.f32.partialorder %v672, %v73
    %vm714 = vcmp.gt.f32.partialorder %v672, %v77
    %vm715 = vcmp.gt.f32.partialorder %v672, %v81
    %vm716 = vcmp.gt.f32.partialorder %v672, %v85
    %vm717 = vcmp.gt.f32.partialorder %v672, %v89
    %vm718 = vcmp.gt.f32.partialorder %v672, %v93
    %vm719 = vcmp.gt.f32.partialorder %v672, %v97
    %vm720 = vcmp.gt.f32.partialorder %v672, %v101
    %vm721 = vcmp.gt.f32.partialorder %v672, %v105
    %vm722 = vcmp.gt.f32.partialorder %v672, %v109
    %vm723 = vcmp.gt.f32.partialorder %v672, %v113
    %vm724 = vcmp.gt.f32.partialorder %v672, %v117
    %vm725 = vcmp.gt.f32.partialorder %v676, %v124
    %vm726 = vcmp.gt.f32.partialorder %v676, %v128
    %vm727 = vcmp.gt.f32.partialorder %v676, %v132
    %vm728 = vcmp.gt.f32.partialorder %v676, %v136
    %vm729 = vcmp.gt.f32.partialorder %v676, %v140
    %vm730 = vcmp.gt.f32.partialorder %v676, %v144
    %vm731 = vcmp.gt.f32.partialorder %v676, %v148
    %vm732 = vcmp.gt.f32.partialorder %v676, %v152
    %vm733 = vcmp.gt.f32.partialorder %v676, %v156
    %vm734 = vcmp.gt.f32.partialorder %v676, %v160
    %vm735 = vcmp.gt.f32.partialorder %v676, %v164
    %vm736 = vcmp.gt.f32.partialorder %v676, %v168
    %vm737 = vcmp.gt.f32.partialorder %v676, %v172
    %vm738 = vcmp.gt.f32.partialorder %v676, %v176
    %vm739 = vcmp.gt.f32.partialorder %v676, %v180
    %vm740 = vcmp.gt.f32.partialorder %v676, %v184
    %vm741 = vcmp.gt.f32.partialorder %v680, %v191
    %vm742 = vcmp.gt.f32.partialorder %v680, %v195
    %vm743 = vcmp.gt.f32.partialorder %v680, %v199
    %vm744 = vcmp.gt.f32.partialorder %v680, %v203
    %vm745 = vcmp.gt.f32.partialorder %v680, %v207
    %vm746 = vcmp.gt.f32.partialorder %v680, %v211
    %vm747 = vcmp.gt.f32.partialorder %v680, %v215
    %vm748 = vcmp.gt.f32.partialorder %v680, %v219
    %vm749 = vcmp.gt.f32.partialorder %v680, %v223
    %vm750 = vcmp.gt.f32.partialorder %v680, %v227
    %vm751 = vcmp.gt.f32.partialorder %v680, %v231
    %vm752 = vcmp.gt.f32.partialorder %v680, %v235
    %vm753 = vcmp.gt.f32.partialorder %v680, %v239
    %vm754 = vcmp.gt.f32.partialorder %v680, %v243
    %vm755 = vcmp.gt.f32.partialorder %v680, %v247
    %vm756 = vcmp.gt.f32.partialorder %v680, %v251
    %vm757 = vcmp.gt.f32.partialorder %v684, %v258
    %vm758 = vcmp.gt.f32.partialorder %v684, %v262
    %vm759 = vcmp.gt.f32.partialorder %v684, %v266
    %vm760 = vcmp.gt.f32.partialorder %v684, %v270
    %vm761 = vcmp.gt.f32.partialorder %v684, %v274
    %vm762 = vcmp.gt.f32.partialorder %v684, %v278
    %vm763 = vcmp.gt.f32.partialorder %v684, %v282
    %vm764 = vcmp.gt.f32.partialorder %v684, %v286
    %vm765 = vcmp.gt.f32.partialorder %v684, %v290
    %vm766 = vcmp.gt.f32.partialorder %v684, %v294
    %vm767 = vcmp.gt.f32.partialorder %v684, %v298
    %vm768 = vcmp.gt.f32.partialorder %v684, %v302
    %vm769 = vcmp.gt.f32.partialorder %v684, %v306
    %vm770 = vcmp.gt.f32.partialorder %v684, %v310
    %vm771 = vcmp.gt.f32.partialorder %v684, %v314
    %vm772 = vcmp.gt.f32.partialorder %v684, %v318
    %vm773 = vcmp.gt.f32.partialorder %v688, %v325
    %vm774 = vcmp.gt.f32.partialorder %v688, %v329
    %vm775 = vcmp.gt.f32.partialorder %v688, %v333
    %vm776 = vcmp.gt.f32.partialorder %v688, %v337
    %vm777 = vcmp.gt.f32.partialorder %v688, %v341
    %vm778 = vcmp.gt.f32.partialorder %v688, %v345
    %vm779 = vcmp.gt.f32.partialorder %v688, %v349
    %vm780 = vcmp.gt.f32.partialorder %v688, %v353
    %vm781 = vcmp.gt.f32.partialorder %v688, %v357
    %vm782 = vcmp.gt.f32.partialorder %v688, %v361
    %vm783 = vcmp.gt.f32.partialorder %v688, %v365
    %vm784 = vcmp.gt.f32.partialorder %v688, %v369
    %vm785 = vcmp.gt.f32.partialorder %v688, %v373
    %vm786 = vcmp.gt.f32.partialorder %v688, %v377
    %vm787 = vcmp.gt.f32.partialorder %v688, %v381
    %vm788 = vcmp.gt.f32.partialorder %v688, %v385
    %vm789 = vcmp.gt.f32.partialorder %v692, %v392
    %vm790 = vcmp.gt.f32.partialorder %v692, %v396
    %vm791 = vcmp.gt.f32.partialorder %v692, %v400
    %vm792 = vcmp.gt.f32.partialorder %v692, %v404
    %vm793 = vcmp.gt.f32.partialorder %v692, %v408
    %vm794 = vcmp.gt.f32.partialorder %v692, %v412
    %vm795 = vcmp.gt.f32.partialorder %v692, %v416
    %vm796 = vcmp.gt.f32.partialorder %v692, %v420
    %vm797 = vcmp.gt.f32.partialorder %v692, %v424
    %vm798 = vcmp.gt.f32.partialorder %v692, %v428
    %vm799 = vcmp.gt.f32.partialorder %v692, %v432
    %vm800 = vcmp.gt.f32.partialorder %v692, %v436
    %vm801 = vcmp.gt.f32.partialorder %v692, %v440
    %vm802 = vcmp.gt.f32.partialorder %v692, %v444
    %vm803 = vcmp.gt.f32.partialorder %v692, %v448
    %vm804 = vcmp.gt.f32.partialorder %v692, %v452
    %vm805 = vcmp.gt.f32.partialorder %v696, %v459
    %vm806 = vcmp.gt.f32.partialorder %v696, %v463
    %vm807 = vcmp.gt.f32.partialorder %v696, %v467
    %vm808 = vcmp.gt.f32.partialorder %v696, %v471
    %vm809 = vcmp.gt.f32.partialorder %v696, %v475
    %vm810 = vcmp.gt.f32.partialorder %v696, %v479
    %vm811 = vcmp.gt.f32.partialorder %v696, %v483
    %vm812 = vcmp.gt.f32.partialorder %v696, %v487
    %vm813 = vcmp.gt.f32.partialorder %v696, %v491
    %vm814 = vcmp.gt.f32.partialorder %v696, %v495
    %vm815 = vcmp.gt.f32.partialorder %v696, %v499
    %vm816 = vcmp.gt.f32.partialorder %v696, %v503
    %vm817 = vcmp.gt.f32.partialorder %v696, %v507
    %vm818 = vcmp.gt.f32.partialorder %v696, %v511
    %vm819 = vcmp.gt.f32.partialorder %v696, %v515
    %vm820 = vcmp.gt.f32.partialorder %v696, %v519
    %vm821 = vcmp.gt.f32.partialorder %v700, %v526
    %vm822 = vcmp.gt.f32.partialorder %v700, %v530
    %vm823 = vcmp.gt.f32.partialorder %v700, %v534
    %vm824 = vcmp.gt.f32.partialorder %v700, %v538
    %vm825 = vcmp.gt.f32.partialorder %v700, %v542
    %vm826 = vcmp.gt.f32.partialorder %v700, %v546
    %vm827 = vcmp.gt.f32.partialorder %v700, %v550
    %vm828 = vcmp.gt.f32.partialorder %v700, %v554
    %vm829 = vcmp.gt.f32.partialorder %v700, %v558
    %vm830 = vcmp.gt.f32.partialorder %v700, %v562
    %vm831 = vcmp.gt.f32.partialorder %v700, %v566
    %vm832 = vcmp.gt.f32.partialorder %v700, %v570
    %vm833 = vcmp.gt.f32.partialorder %v700, %v574
    %vm834 = vcmp.gt.f32.partialorder %v700, %v578
    %vm835 = vcmp.gt.f32.partialorder %v700, %v582
    %vm836 = vcmp.gt.f32.partialorder %v700, %v586
    %vm837 = vcmp.eq.f32.partialorder %v672, %v57
    %vm838 = vcmp.eq.f32.partialorder %v672, %v61
    %vm839 = vcmp.eq.f32.partialorder %v672, %v65
    %vm840 = vcmp.eq.f32.partialorder %v672, %v69
    %vm841 = vcmp.eq.f32.partialorder %v672, %v73
    %vm842 = vcmp.eq.f32.partialorder %v672, %v77
    %vm843 = vcmp.eq.f32.partialorder %v672, %v81
    %vm844 = vcmp.eq.f32.partialorder %v672, %v85
    %vm845 = vcmp.eq.f32.partialorder %v672, %v89
    %vm846 = vcmp.eq.f32.partialorder %v672, %v93
    %vm847 = vcmp.eq.f32.partialorder %v672, %v97
    %vm848 = vcmp.eq.f32.partialorder %v672, %v101
    %vm849 = vcmp.eq.f32.partialorder %v672, %v105
    %vm850 = vcmp.eq.f32.partialorder %v672, %v109
    %vm851 = vcmp.eq.f32.partialorder %v672, %v113
    %vm852 = vcmp.eq.f32.partialorder %v672, %v117
    %vm853 = vcmp.eq.f32.partialorder %v676, %v124
    %vm854 = vcmp.eq.f32.partialorder %v676, %v128
    %vm855 = vcmp.eq.f32.partialorder %v676, %v132
    %vm856 = vcmp.eq.f32.partialorder %v676, %v136
    %vm857 = vcmp.eq.f32.partialorder %v676, %v140
    %vm858 = vcmp.eq.f32.partialorder %v676, %v144
    %vm859 = vcmp.eq.f32.partialorder %v676, %v148
    %vm860 = vcmp.eq.f32.partialorder %v676, %v152
    %vm861 = vcmp.eq.f32.partialorder %v676, %v156
    %vm862 = vcmp.eq.f32.partialorder %v676, %v160
    %vm863 = vcmp.eq.f32.partialorder %v676, %v164
    %vm864 = vcmp.eq.f32.partialorder %v676, %v168
    %vm865 = vcmp.eq.f32.partialorder %v676, %v172
    %vm866 = vcmp.eq.f32.partialorder %v676, %v176
    %vm867 = vcmp.eq.f32.partialorder %v676, %v180
    %vm868 = vcmp.eq.f32.partialorder %v676, %v184
    %vm869 = vcmp.eq.f32.partialorder %v680, %v191
    %vm870 = vcmp.eq.f32.partialorder %v680, %v195
    %vm871 = vcmp.eq.f32.partialorder %v680, %v199
    %vm872 = vcmp.eq.f32.partialorder %v680, %v203
    %vm873 = vcmp.eq.f32.partialorder %v680, %v207
    %vm874 = vcmp.eq.f32.partialorder %v680, %v211
    %vm875 = vcmp.eq.f32.partialorder %v680, %v215
    %vm876 = vcmp.eq.f32.partialorder %v680, %v219
    %vm877 = vcmp.eq.f32.partialorder %v680, %v223
    %vm878 = vcmp.eq.f32.partialorder %v680, %v227
    %vm879 = vcmp.eq.f32.partialorder %v680, %v231
    %vm880 = vcmp.eq.f32.partialorder %v680, %v235
    %vm881 = vcmp.eq.f32.partialorder %v680, %v239
    %vm882 = vcmp.eq.f32.partialorder %v680, %v243
    %vm883 = vcmp.eq.f32.partialorder %v680, %v247
    %vm884 = vcmp.eq.f32.partialorder %v680, %v251
    %vm885 = vcmp.eq.f32.partialorder %v684, %v258
    %vm886 = vcmp.eq.f32.partialorder %v684, %v262
    %vm887 = vcmp.eq.f32.partialorder %v684, %v266
    %vm888 = vcmp.eq.f32.partialorder %v684, %v270
    %vm889 = vcmp.eq.f32.partialorder %v684, %v274
    %vm890 = vcmp.eq.f32.partialorder %v684, %v278
    %vm891 = vcmp.eq.f32.partialorder %v684, %v282
    %vm892 = vcmp.eq.f32.partialorder %v684, %v286
    %vm893 = vcmp.eq.f32.partialorder %v684, %v290
    %vm894 = vcmp.eq.f32.partialorder %v684, %v294
    %vm895 = vcmp.eq.f32.partialorder %v684, %v298
    %vm896 = vcmp.eq.f32.partialorder %v684, %v302
    %vm897 = vcmp.eq.f32.partialorder %v684, %v306
    %vm898 = vcmp.eq.f32.partialorder %v684, %v310
    %vm899 = vcmp.eq.f32.partialorder %v684, %v314
    %vm900 = vcmp.eq.f32.partialorder %v684, %v318
    %vm901 = vcmp.eq.f32.partialorder %v688, %v325
    %vm902 = vcmp.eq.f32.partialorder %v688, %v329
    %vm903 = vcmp.eq.f32.partialorder %v688, %v333
    %vm904 = vcmp.eq.f32.partialorder %v688, %v337
    %vm905 = vcmp.eq.f32.partialorder %v688, %v341
    %vm906 = vcmp.eq.f32.partialorder %v688, %v345
    %vm907 = vcmp.eq.f32.partialorder %v688, %v349
    %vm908 = vcmp.eq.f32.partialorder %v688, %v353
    %vm909 = vcmp.eq.f32.partialorder %v688, %v357
    %vm910 = vcmp.eq.f32.partialorder %v688, %v361
    %vm911 = vcmp.eq.f32.partialorder %v688, %v365
    %vm912 = vcmp.eq.f32.partialorder %v688, %v369
    %vm913 = vcmp.eq.f32.partialorder %v688, %v373
    %vm914 = vcmp.eq.f32.partialorder %v688, %v377
    %vm915 = vcmp.eq.f32.partialorder %v688, %v381
    %vm916 = vcmp.eq.f32.partialorder %v688, %v385
    %vm917 = vcmp.eq.f32.partialorder %v692, %v392
    %vm918 = vcmp.eq.f32.partialorder %v692, %v396
    %vm919 = vcmp.eq.f32.partialorder %v692, %v400
    %vm920 = vcmp.eq.f32.partialorder %v692, %v404
    %vm921 = vcmp.eq.f32.partialorder %v692, %v408
    %vm922 = vcmp.eq.f32.partialorder %v692, %v412
    %vm923 = vcmp.eq.f32.partialorder %v692, %v416
    %vm924 = vcmp.eq.f32.partialorder %v692, %v420
    %vm925 = vcmp.eq.f32.partialorder %v692, %v424
    %vm926 = vcmp.eq.f32.partialorder %v692, %v428
    %vm927 = vcmp.eq.f32.partialorder %v692, %v432
    %vm928 = vcmp.eq.f32.partialorder %v692, %v436
    %vm929 = vcmp.eq.f32.partialorder %v692, %v440
    %vm930 = vcmp.eq.f32.partialorder %v692, %v444
    %vm931 = vcmp.eq.f32.partialorder %v692, %v448
    %vm932 = vcmp.eq.f32.partialorder %v692, %v452
    %vm933 = vcmp.eq.f32.partialorder %v696, %v459
    %vm934 = vcmp.eq.f32.partialorder %v696, %v463
    %vm935 = vcmp.eq.f32.partialorder %v696, %v467
    %vm936 = vcmp.eq.f32.partialorder %v696, %v471
    %vm937 = vcmp.eq.f32.partialorder %v696, %v475
    %vm938 = vcmp.eq.f32.partialorder %v696, %v479
    %vm939 = vcmp.eq.f32.partialorder %v696, %v483
    %vm940 = vcmp.eq.f32.partialorder %v696, %v487
    %vm941 = vcmp.eq.f32.partialorder %v696, %v491
    %vm942 = vcmp.eq.f32.partialorder %v696, %v495
    %vm943 = vcmp.eq.f32.partialorder %v696, %v499
    %vm944 = vcmp.eq.f32.partialorder %v696, %v503
    %vm945 = vcmp.eq.f32.partialorder %v696, %v507
    %vm946 = vcmp.eq.f32.partialorder %v696, %v511
    %vm947 = vcmp.eq.f32.partialorder %v696, %v515
    %vm948 = vcmp.eq.f32.partialorder %v696, %v519
    %vm949 = vcmp.eq.f32.partialorder %v700, %v526
    %vm950 = vcmp.eq.f32.partialorder %v700, %v530
    %vm951 = vcmp.eq.f32.partialorder %v700, %v534
    %vm952 = vcmp.eq.f32.partialorder %v700, %v538
    %vm953 = vcmp.eq.f32.partialorder %v700, %v542
    %vm954 = vcmp.eq.f32.partialorder %v700, %v546
    %vm955 = vcmp.eq.f32.partialorder %v700, %v550
    %vm956 = vcmp.eq.f32.partialorder %v700, %v554
    %vm957 = vcmp.eq.f32.partialorder %v700, %v558
    %vm958 = vcmp.eq.f32.partialorder %v700, %v562
    %vm959 = vcmp.eq.f32.partialorder %v700, %v566
    %vm960 = vcmp.eq.f32.partialorder %v700, %v570
    %vm961 = vcmp.eq.f32.partialorder %v700, %v574
    %vm962 = vcmp.eq.f32.partialorder %v700, %v578
    %vm963 = vcmp.eq.f32.partialorder %v700, %v582
    %vm964 = vcmp.eq.f32.partialorder %v700, %v586
    %v965 = vsel %vm653, 1, 0
    %v966 = vsel %vm654, 1, 0
    %v967 = vsel %vm655, 1, 0
    %v968 = vsel %vm656, 1, 0
    %v969 = vsel %vm657, 1, 0
    %v970 = vsel %vm658, 1, 0
    %v971 = vsel %vm659, 1, 0
    %v972 = vsel %vm660, 1, 0
    %v973 = vsel %vm661, 1, 0
    %v974 = vsel %vm662, 1, 0
    %v975 = vsel %vm663, 1, 0
    %v976 = vsel %vm664, 1, 0
    %v977 = vsel %vm665, 1, 0
    %v978 = vsel %vm666, 1, 0
    %v979 = vsel %vm667, 1, 0
    %v980 = vsel %vm668, 1, 0
    %vm981 = vcmp.eq.s32.totalorder %v965, 1
    %vm982 = vcmp.eq.s32.totalorder %v966, 1
    %vm983 = vcmp.eq.s32.totalorder %v967, 1
    %vm984 = vcmp.eq.s32.totalorder %v968, 1
    %vm985 = vcmp.eq.s32.totalorder %v969, 1
    %vm986 = vcmp.eq.s32.totalorder %v970, 1
    %vm987 = vcmp.eq.s32.totalorder %v971, 1
    %vm988 = vcmp.eq.s32.totalorder %v972, 1
    %vm989 = vcmp.eq.s32.totalorder %v973, 1
    %vm990 = vcmp.eq.s32.totalorder %v974, 1
    %vm991 = vcmp.eq.s32.totalorder %v975, 1
    %vm992 = vcmp.eq.s32.totalorder %v976, 1
    %vm993 = vcmp.eq.s32.totalorder %v977, 1
    %vm994 = vcmp.eq.s32.totalorder %v978, 1
    %vm995 = vcmp.eq.s32.totalorder %v979, 1
    %vm996 = vcmp.eq.s32.totalorder %v980, 1
    %vm997 = vmand %vm837, %vm981
    %vm998 = vmand %vm838, %vm982
    %vm999 = vmand %vm839, %vm983
    %vm1000 = vmand %vm840, %vm984
    %vm1001 = vmand %vm841, %vm985
    %vm1002 = vmand %vm842, %vm986
    %vm1003 = vmand %vm843, %vm987
    %vm1004 = vmand %vm844, %vm988
    %vm1005 = vmand %vm845, %vm989
    %vm1006 = vmand %vm846, %vm990
    %vm1007 = vmand %vm847, %vm991
    %vm1008 = vmand %vm848, %vm992
    %vm1009 = vmand %vm849, %vm993
    %vm1010 = vmand %vm850, %vm994
    %vm1011 = vmand %vm851, %vm995
    %vm1012 = vmand %vm852, %vm996
    %vm1013 = vmand %vm853, %vm981
    %vm1014 = vmand %vm854, %vm982
    %vm1015 = vmand %vm855, %vm983
    %vm1016 = vmand %vm856, %vm984
    %vm1017 = vmand %vm857, %vm985
    %vm1018 = vmand %vm858, %vm986
    %vm1019 = vmand %vm859, %vm987
    %vm1020 = vmand %vm860, %vm988
    %vm1021 = vmand %vm861, %vm989
    %vm1022 = vmand %vm862, %vm990
    %vm1023 = vmand %vm863, %vm991
    %vm1024 = vmand %vm864, %vm992
    %vm1025 = vmand %vm865, %vm993
    %vm1026 = vmand %vm866, %vm994
    %vm1027 = vmand %vm867, %vm995
    %vm1028 = vmand %vm868, %vm996
    %vm1029 = vmand %vm869, %vm981
    %vm1030 = vmand %vm870, %vm982
    %vm1031 = vmand %vm871, %vm983
    %vm1032 = vmand %vm872, %vm984
    %vm1033 = vmand %vm873, %vm985
    %vm1034 = vmand %vm874, %vm986
    %vm1035 = vmand %vm875, %vm987
    %vm1036 = vmand %vm876, %vm988
    %vm1037 = vmand %vm877, %vm989
    %vm1038 = vmand %vm878, %vm990
    %vm1039 = vmand %vm879, %vm991
    %vm1040 = vmand %vm880, %vm992
    %vm1041 = vmand %vm881, %vm993
    %vm1042 = vmand %vm882, %vm994
    %vm1043 = vmand %vm883, %vm995
    %vm1044 = vmand %vm884, %vm996
    %vm1045 = vmand %vm885, %vm981
    %vm1046 = vmand %vm886, %vm982
    %vm1047 = vmand %vm887, %vm983
    %vm1048 = vmand %vm888, %vm984
    %vm1049 = vmand %vm889, %vm985
    %vm1050 = vmand %vm890, %vm986
    %vm1051 = vmand %vm891, %vm987
    %vm1052 = vmand %vm892, %vm988
    %vm1053 = vmand %vm893, %vm989
    %vm1054 = vmand %vm894, %vm990
    %vm1055 = vmand %vm895, %vm991
    %vm1056 = vmand %vm896, %vm992
    %vm1057 = vmand %vm897, %vm993
    %vm1058 = vmand %vm898, %vm994
    %vm1059 = vmand %vm899, %vm995
    %vm1060 = vmand %vm900, %vm996
    %vm1061 = vmand %vm901, %vm981
    %vm1062 = vmand %vm902, %vm982
    %vm1063 = vmand %vm903, %vm983
    %vm1064 = vmand %vm904, %vm984
    %vm1065 = vmand %vm905, %vm985
    %vm1066 = vmand %vm906, %vm986
    %vm1067 = vmand %vm907, %vm987
    %vm1068 = vmand %vm908, %vm988
    %vm1069 = vmand %vm909, %vm989
    %vm1070 = vmand %vm910, %vm990
    %vm1071 = vmand %vm911, %vm991
    %vm1072 = vmand %vm912, %vm992
    %vm1073 = vmand %vm913, %vm993
    %vm1074 = vmand %vm914, %vm994
    %vm1075 = vmand %vm915, %vm995
    %vm1076 = vmand %vm916, %vm996
    %vm1077 = vmand %vm917, %vm981
    %vm1078 = vmand %vm918, %vm982
    %vm1079 = vmand %vm919, %vm983
    %vm1080 = vmand %vm920, %vm984
    %vm1081 = vmand %vm921, %vm985
    %vm1082 = vmand %vm922, %vm986
    %vm1083 = vmand %vm923, %vm987
    %vm1084 = vmand %vm924, %vm988
    %vm1085 = vmand %vm925, %vm989
    %vm1086 = vmand %vm926, %vm990
    %vm1087 = vmand %vm927, %vm991
    %vm1088 = vmand %vm928, %vm992
    %vm1089 = vmand %vm929, %vm993
    %vm1090 = vmand %vm930, %vm994
    %vm1091 = vmand %vm931, %vm995
    %vm1092 = vmand %vm932, %vm996
    %vm1093 = vmand %vm933, %vm981
    %vm1094 = vmand %vm934, %vm982
    %vm1095 = vmand %vm935, %vm983
    %vm1096 = vmand %vm936, %vm984
    %vm1097 = vmand %vm937, %vm985
    %vm1098 = vmand %vm938, %vm986
    %vm1099 = vmand %vm939, %vm987
    %vm1100 = vmand %vm940, %vm988
    %vm1101 = vmand %vm941, %vm989
    %vm1102 = vmand %vm942, %vm990
    %vm1103 = vmand %vm943, %vm991
    %vm1104 = vmand %vm944, %vm992
    %vm1105 = vmand %vm945, %vm993
    %vm1106 = vmand %vm946, %vm994
    %vm1107 = vmand %vm947, %vm995
    %vm1108 = vmand %vm948, %vm996
    %vm1109 = vmand %vm949, %vm981
    %vm1110 = vmand %vm950, %vm982
    %vm1111 = vmand %vm951, %vm983
    %vm1112 = vmand %vm952, %vm984
    %vm1113 = vmand %vm953, %vm985
    %vm1114 = vmand %vm954, %vm986
    %vm1115 = vmand %vm955, %vm987
    %vm1116 = vmand %vm956, %vm988
    %vm1117 = vmand %vm957, %vm989
    %vm1118 = vmand %vm958, %vm990
    %vm1119 = vmand %vm959, %vm991
    %vm1120 = vmand %vm960, %vm992
    %vm1121 = vmand %vm961, %vm993
    %vm1122 = vmand %vm962, %vm994
    %vm1123 = vmand %vm963, %vm995
    %vm1124 = vmand %vm964, %vm996
    %vm1125 = vmor %vm709, %vm997
    %vm1126 = vmor %vm710, %vm998
    %vm1127 = vmor %vm711, %vm999
    %vm1128 = vmor %vm712, %vm1000
    %vm1129 = vmor %vm713, %vm1001
    %vm1130 = vmor %vm714, %vm1002
    %vm1131 = vmor %vm715, %vm1003
    %vm1132 = vmor %vm716, %vm1004
    %vm1133 = vmor %vm717, %vm1005
    %vm1134 = vmor %vm718, %vm1006
    %vm1135 = vmor %vm719, %vm1007
    %vm1136 = vmor %vm720, %vm1008
    %vm1137 = vmor %vm721, %vm1009
    %vm1138 = vmor %vm722, %vm1010
    %vm1139 = vmor %vm723, %vm1011
    %vm1140 = vmor %vm724, %vm1012
    %vm1141 = vmor %vm725, %vm1013
    %vm1142 = vmor %vm726, %vm1014
    %vm1143 = vmor %vm727, %vm1015
    %vm1144 = vmor %vm728, %vm1016
    %vm1145 = vmor %vm729, %vm1017
    %vm1146 = vmor %vm730, %vm1018
    %vm1147 = vmor %vm731, %vm1019
    %vm1148 = vmor %vm732, %vm1020
    %vm1149 = vmor %vm733, %vm1021
    %vm1150 = vmor %vm734, %vm1022
    %vm1151 = vmor %vm735, %vm1023
    %vm1152 = vmor %vm736, %vm1024
    %vm1153 = vmor %vm737, %vm1025
    %vm1154 = vmor %vm738, %vm1026
    %vm1155 = vmor %vm739, %vm1027
    %vm1156 = vmor %vm740, %vm1028
    %vm1157 = vmor %vm741, %vm1029
    %vm1158 = vmor %vm742, %vm1030
    %vm1159 = vmor %vm743, %vm1031
    %vm1160 = vmor %vm744, %vm1032
    %vm1161 = vmor %vm745, %vm1033
    %vm1162 = vmor %vm746, %vm1034
    %vm1163 = vmor %vm747, %vm1035
    %vm1164 = vmor %vm748, %vm1036
    %vm1165 = vmor %vm749, %vm1037
    %vm1166 = vmor %vm750, %vm1038
    %vm1167 = vmor %vm751, %vm1039
    %vm1168 = vmor %vm752, %vm1040
    %vm1169 = vmor %vm753, %vm1041
    %vm1170 = vmor %vm754, %vm1042
    %vm1171 = vmor %vm755, %vm1043
    %vm1172 = vmor %vm756, %vm1044
    %vm1173 = vmor %vm757, %vm1045
    %vm1174 = vmor %vm758, %vm1046
    %vm1175 = vmor %vm759, %vm1047
    %vm1176 = vmor %vm760, %vm1048
    %vm1177 = vmor %vm761, %vm1049
    %vm1178 = vmor %vm762, %vm1050
    %vm1179 = vmor %vm763, %vm1051
    %vm1180 = vmor %vm764, %vm1052
    %vm1181 = vmor %vm765, %vm1053
    %vm1182 = vmor %vm766, %vm1054
    %vm1183 = vmor %vm767, %vm1055
    %vm1184 = vmor %vm768, %vm1056
    %vm1185 = vmor %vm769, %vm1057
    %vm1186 = vmor %vm770, %vm1058
    %vm1187 = vmor %vm771, %vm1059
    %vm1188 = vmor %vm772, %vm1060
    %vm1189 = vmor %vm773, %vm1061
    %vm1190 = vmor %vm774, %vm1062
    %vm1191 = vmor %vm775, %vm1063
    %vm1192 = vmor %vm776, %vm1064
    %vm1193 = vmor %vm777, %vm1065
    %vm1194 = vmor %vm778, %vm1066
    %vm1195 = vmor %vm779, %vm1067
    %vm1196 = vmor %vm780, %vm1068
    %vm1197 = vmor %vm781, %vm1069
    %vm1198 = vmor %vm782, %vm1070
    %vm1199 = vmor %vm783, %vm1071
    %vm1200 = vmor %vm784, %vm1072
    %vm1201 = vmor %vm785, %vm1073
    %vm1202 = vmor %vm786, %vm1074
    %vm1203 = vmor %vm787, %vm1075
    %vm1204 = vmor %vm788, %vm1076
    %vm1205 = vmor %vm789, %vm1077
    %vm1206 = vmor %vm790, %vm1078
    %vm1207 = vmor %vm791, %vm1079
    %vm1208 = vmor %vm792, %vm1080
    %vm1209 = vmor %vm793, %vm1081
    %vm1210 = vmor %vm794, %vm1082
    %vm1211 = vmor %vm795, %vm1083
    %vm1212 = vmor %vm796, %vm1084
    %vm1213 = vmor %vm797, %vm1085
    %vm1214 = vmor %vm798, %vm1086
    %vm1215 = vmor %vm799, %vm1087
    %vm1216 = vmor %vm800, %vm1088
    %vm1217 = vmor %vm801, %vm1089
    %vm1218 = vmor %vm802, %vm1090
    %vm1219 = vmor %vm803, %vm1091
    %vm1220 = vmor %vm804, %vm1092
    %vm1221 = vmor %vm805, %vm1093
    %vm1222 = vmor %vm806, %vm1094
    %vm1223 = vmor %vm807, %vm1095
    %vm1224 = vmor %vm808, %vm1096
    %vm1225 = vmor %vm809, %vm1097
    %vm1226 = vmor %vm810, %vm1098
    %vm1227 = vmor %vm811, %vm1099
    %vm1228 = vmor %vm812, %vm1100
    %vm1229 = vmor %vm813, %vm1101
    %vm1230 = vmor %vm814, %vm1102
    %vm1231 = vmor %vm815, %vm1103
    %vm1232 = vmor %vm816, %vm1104
    %vm1233 = vmor %vm817, %vm1105
    %vm1234 = vmor %vm818, %vm1106
    %vm1235 = vmor %vm819, %vm1107
    %vm1236 = vmor %vm820, %vm1108
    %vm1237 = vmor %vm821, %vm1109
    %vm1238 = vmor %vm822, %vm1110
    %vm1239 = vmor %vm823, %vm1111
    %vm1240 = vmor %vm824, %vm1112
    %vm1241 = vmor %vm825, %vm1113
    %vm1242 = vmor %vm826, %vm1114
    %vm1243 = vmor %vm827, %vm1115
    %vm1244 = vmor %vm828, %vm1116
    %vm1245 = vmor %vm829, %vm1117
    %vm1246 = vmor %vm830, %vm1118
    %vm1247 = vmor %vm831, %vm1119
    %vm1248 = vmor %vm832, %vm1120
    %vm1249 = vmor %vm833, %vm1121
    %vm1250 = vmor %vm834, %vm1122
    %vm1251 = vmor %vm835, %vm1123
    %vm1252 = vmor %vm836, %vm1124
    %v1253 = vsel %vm1125, 1, 0
    %v1254 = vsel %vm1126, 1, 0
    %v1255 = vsel %vm1127, 1, 0
    %v1256 = vsel %vm1128, 1, 0
    %v1257 = vsel %vm1129, 1, 0
    %v1258 = vsel %vm1130, 1, 0
    %v1259 = vsel %vm1131, 1, 0
    %v1260 = vsel %vm1132, 1, 0
    %v1261 = vsel %vm1133, 1, 0
    %v1262 = vsel %vm1134, 1, 0
    %v1263 = vsel %vm1135, 1, 0
    %v1264 = vsel %vm1136, 1, 0
    %v1265 = vsel %vm1137, 1, 0
    %v1266 = vsel %vm1138, 1, 0
    %v1267 = vsel %vm1139, 1, 0
    %v1268 = vsel %vm1140, 1, 0
    %v1269 = vsel %vm1141, 1, 0
    %v1270 = vsel %vm1142, 1, 0
    %v1271 = vsel %vm1143, 1, 0
    %v1272 = vsel %vm1144, 1, 0
    %v1273 = vsel %vm1145, 1, 0
    %v1274 = vsel %vm1146, 1, 0
    %v1275 = vsel %vm1147, 1, 0
    %v1276 = vsel %vm1148, 1, 0
    %v1277 = vsel %vm1149, 1, 0
    %v1278 = vsel %vm1150, 1, 0
    %v1279 = vsel %vm1151, 1, 0
    %v1280 = vsel %vm1152, 1, 0
    %v1281 = vsel %vm1153, 1, 0
    %v1282 = vsel %vm1154, 1, 0
    %v1283 = vsel %vm1155, 1, 0
    %v1284 = vsel %vm1156, 1, 0
    %v1285 = vsel %vm1157, 1, 0
    %v1286 = vsel %vm1158, 1, 0
    %v1287 = vsel %vm1159, 1, 0
    %v1288 = vsel %vm1160, 1, 0
    %v1289 = vsel %vm1161, 1, 0
    %v1290 = vsel %vm1162, 1, 0
    %v1291 = vsel %vm1163, 1, 0
    %v1292 = vsel %vm1164, 1, 0
    %v1293 = vsel %vm1165, 1, 0
    %v1294 = vsel %vm1166, 1, 0
    %v1295 = vsel %vm1167, 1, 0
    %v1296 = vsel %vm1168, 1, 0
    %v1297 = vsel %vm1169, 1, 0
    %v1298 = vsel %vm1170, 1, 0
    %v1299 = vsel %vm1171, 1, 0
    %v1300 = vsel %vm1172, 1, 0
    %v1301 = vsel %vm1173, 1, 0
    %v1302 = vsel %vm1174, 1, 0
    %v1303 = vsel %vm1175, 1, 0
    %v1304 = vsel %vm1176, 1, 0
    %v1305 = vsel %vm1177, 1, 0
    %v1306 = vsel %vm1178, 1, 0
    %v1307 = vsel %vm1179, 1, 0
    %v1308 = vsel %vm1180, 1, 0
    %v1309 = vsel %vm1181, 1, 0
    %v1310 = vsel %vm1182, 1, 0
    %v1311 = vsel %vm1183, 1, 0
    %v1312 = vsel %vm1184, 1, 0
    %v1313 = vsel %vm1185, 1, 0
    %v1314 = vsel %vm1186, 1, 0
    %v1315 = vsel %vm1187, 1, 0
    %v1316 = vsel %vm1188, 1, 0
    %v1317 = vsel %vm1189, 1, 0
    %v1318 = vsel %vm1190, 1, 0
    %v1319 = vsel %vm1191, 1, 0
    %v1320 = vsel %vm1192, 1, 0
    %v1321 = vsel %vm1193, 1, 0
    %v1322 = vsel %vm1194, 1, 0
    %v1323 = vsel %vm1195, 1, 0
    %v1324 = vsel %vm1196, 1, 0
    %v1325 = vsel %vm1197, 1, 0
    %v1326 = vsel %vm1198, 1, 0
    %v1327 = vsel %vm1199, 1, 0
    %v1328 = vsel %vm1200, 1, 0
    %v1329 = vsel %vm1201, 1, 0
    %v1330 = vsel %vm1202, 1, 0
    %v1331 = vsel %vm1203, 1, 0
    %v1332 = vsel %vm1204, 1, 0
    %v1333 = vsel %vm1205, 1, 0
    %v1334 = vsel %vm1206, 1, 0
    %v1335 = vsel %vm1207, 1, 0
    %v1336 = vsel %vm1208, 1, 0
    %v1337 = vsel %vm1209, 1, 0
    %v1338 = vsel %vm1210, 1, 0
    %v1339 = vsel %vm1211, 1, 0
    %v1340 = vsel %vm1212, 1, 0
    %v1341 = vsel %vm1213, 1, 0
    %v1342 = vsel %vm1214, 1, 0
    %v1343 = vsel %vm1215, 1, 0
    %v1344 = vsel %vm1216, 1, 0
    %v1345 = vsel %vm1217, 1, 0
    %v1346 = vsel %vm1218, 1, 0
    %v1347 = vsel %vm1219, 1, 0
    %v1348 = vsel %vm1220, 1, 0
    %v1349 = vsel %vm1221, 1, 0
    %v1350 = vsel %vm1222, 1, 0
    %v1351 = vsel %vm1223, 1, 0
    %v1352 = vsel %vm1224, 1, 0
    %v1353 = vsel %vm1225, 1, 0
    %v1354 = vsel %vm1226, 1, 0
    %v1355 = vsel %vm1227, 1, 0
    %v1356 = vsel %vm1228, 1, 0
    %v1357 = vsel %vm1229, 1, 0
    %v1358 = vsel %vm1230, 1, 0
    %v1359 = vsel %vm1231, 1, 0
    %v1360 = vsel %vm1232, 1, 0
    %v1361 = vsel %vm1233, 1, 0
    %v1362 = vsel %vm1234, 1, 0
    %v1363 = vsel %vm1235, 1, 0
    %v1364 = vsel %vm1236, 1, 0
    %v1365 = vsel %vm1237, 1, 0
    %v1366 = vsel %vm1238, 1, 0
    %v1367 = vsel %vm1239, 1, 0
    %v1368 = vsel %vm1240, 1, 0
    %v1369 = vsel %vm1241, 1, 0
    %v1370 = vsel %vm1242, 1, 0
    %v1371 = vsel %vm1243, 1, 0
    %v1372 = vsel %vm1244, 1, 0
    %v1373 = vsel %vm1245, 1, 0
    %v1374 = vsel %vm1246, 1, 0
    %v1375 = vsel %vm1247, 1, 0
    %v1376 = vsel %vm1248, 1, 0
    %v1377 = vsel %vm1249, 1, 0
    %v1378 = vsel %vm1250, 1, 0
    %v1379 = vsel %vm1251, 1, 0
    %v1380 = vsel %vm1252, 1, 0
    %v1381 = vcvt.s32.f32 %v1253
    %v1382 = vcvt.s32.f32 %v1254
    %v1383 = vcvt.s32.f32 %v1255
    %v1384 = vcvt.s32.f32 %v1256
    %v1385 = vcvt.s32.f32 %v1257
    %v1386 = vcvt.s32.f32 %v1258
    %v1387 = vcvt.s32.f32 %v1259
    %v1388 = vcvt.s32.f32 %v1260
    %v1389 = vcvt.s32.f32 %v1261
    %v1390 = vcvt.s32.f32 %v1262
    %v1391 = vcvt.s32.f32 %v1263
    %v1392 = vcvt.s32.f32 %v1264
    %v1393 = vcvt.s32.f32 %v1265
    %v1394 = vcvt.s32.f32 %v1266
    %v1395 = vcvt.s32.f32 %v1267
    %v1396 = vcvt.s32.f32 %v1268
    %v1397 = vcvt.s32.f32 %v1269
    %v1398 = vcvt.s32.f32 %v1270
    %v1399 = vcvt.s32.f32 %v1271
    %v1400 = vcvt.s32.f32 %v1272
    %v1401 = vcvt.s32.f32 %v1273
    %v1402 = vcvt.s32.f32 %v1274
    %v1403 = vcvt.s32.f32 %v1275
    %v1404 = vcvt.s32.f32 %v1276
    %v1405 = vcvt.s32.f32 %v1277
    %v1406 = vcvt.s32.f32 %v1278
    %v1407 = vcvt.s32.f32 %v1279
    %v1408 = vcvt.s32.f32 %v1280
    %v1409 = vcvt.s32.f32 %v1281
    %v1410 = vcvt.s32.f32 %v1282
    %v1411 = vcvt.s32.f32 %v1283
    %v1412 = vcvt.s32.f32 %v1284
    %v1413 = vcvt.s32.f32 %v1285
    %v1414 = vcvt.s32.f32 %v1286
    %v1415 = vcvt.s32.f32 %v1287
    %v1416 = vcvt.s32.f32 %v1288
    %v1417 = vcvt.s32.f32 %v1289
    %v1418 = vcvt.s32.f32 %v1290
    %v1419 = vcvt.s32.f32 %v1291
    %v1420 = vcvt.s32.f32 %v1292
    %v1421 = vcvt.s32.f32 %v1293
    %v1422 = vcvt.s32.f32 %v1294
    %v1423 = vcvt.s32.f32 %v1295
    %v1424 = vcvt.s32.f32 %v1296
    %v1425 = vcvt.s32.f32 %v1297
    %v1426 = vcvt.s32.f32 %v1298
    %v1427 = vcvt.s32.f32 %v1299
    %v1428 = vcvt.s32.f32 %v1300
    %v1429 = vcvt.s32.f32 %v1301
    %v1430 = vcvt.s32.f32 %v1302
    %v1431 = vcvt.s32.f32 %v1303
    %v1432 = vcvt.s32.f32 %v1304
    %v1433 = vcvt.s32.f32 %v1305
    %v1434 = vcvt.s32.f32 %v1306
    %v1435 = vcvt.s32.f32 %v1307
    %v1436 = vcvt.s32.f32 %v1308
    %v1437 = vcvt.s32.f32 %v1309
    %v1438 = vcvt.s32.f32 %v1310
    %v1439 = vcvt.s32.f32 %v1311
    %v1440 = vcvt.s32.f32 %v1312
    %v1441 = vcvt.s32.f32 %v1313
    %v1442 = vcvt.s32.f32 %v1314
    %v1443 = vcvt.s32.f32 %v1315
    %v1444 = vcvt.s32.f32 %v1316
    %v1445 = vcvt.s32.f32 %v1317
    %v1446 = vcvt.s32.f32 %v1318
    %v1447 = vcvt.s32.f32 %v1319
    %v1448 = vcvt.s32.f32 %v1320
    %v1449 = vcvt.s32.f32 %v1321
    %v1450 = vcvt.s32.f32 %v1322
    %v1451 = vcvt.s32.f32 %v1323
    %v1452 = vcvt.s32.f32 %v1324
    %v1453 = vcvt.s32.f32 %v1325
    %v1454 = vcvt.s32.f32 %v1326
    %v1455 = vcvt.s32.f32 %v1327
    %v1456 = vcvt.s32.f32 %v1328
    %v1457 = vcvt.s32.f32 %v1329
    %v1458 = vcvt.s32.f32 %v1330
    %v1459 = vcvt.s32.f32 %v1331
    %v1460 = vcvt.s32.f32 %v1332
    %v1461 = vcvt.s32.f32 %v1333
    %v1462 = vcvt.s32.f32 %v1334
    %v1463 = vcvt.s32.f32 %v1335
    %v1464 = vcvt.s32.f32 %v1336
    %v1465 = vcvt.s32.f32 %v1337
    %v1466 = vcvt.s32.f32 %v1338
    %v1467 = vcvt.s32.f32 %v1339
    %v1468 = vcvt.s32.f32 %v1340
    %v1469 = vcvt.s32.f32 %v1341
    %v1470 = vcvt.s32.f32 %v1342
    %v1471 = vcvt.s32.f32 %v1343
    %v1472 = vcvt.s32.f32 %v1344
    %v1473 = vcvt.s32.f32 %v1345
    %v1474 = vcvt.s32.f32 %v1346
    %v1475 = vcvt.s32.f32 %v1347
    %v1476 = vcvt.s32.f32 %v1348
    %v1477 = vcvt.s32.f32 %v1349
    %v1478 = vcvt.s32.f32 %v1350
    %v1479 = vcvt.s32.f32 %v1351
    %v1480 = vcvt.s32.f32 %v1352
    %v1481 = vcvt.s32.f32 %v1353
    %v1482 = vcvt.s32.f32 %v1354
    %v1483 = vcvt.s32.f32 %v1355
    %v1484 = vcvt.s32.f32 %v1356
    %v1485 = vcvt.s32.f32 %v1357
    %v1486 = vcvt.s32.f32 %v1358
    %v1487 = vcvt.s32.f32 %v1359
    %v1488 = vcvt.s32.f32 %v1360
    %v1489 = vcvt.s32.f32 %v1361
    %v1490 = vcvt.s32.f32 %v1362
    %v1491 = vcvt.s32.f32 %v1363
    %v1492 = vcvt.s32.f32 %v1364
    %v1493 = vcvt.s32.f32 %v1365
    %v1494 = vcvt.s32.f32 %v1366
    %v1495 = vcvt.s32.f32 %v1367
    %v1496 = vcvt.s32.f32 %v1368
    %v1497 = vcvt.s32.f32 %v1369
    %v1498 = vcvt.s32.f32 %v1370
    %v1499 = vcvt.s32.f32 %v1371
    %v1500 = vcvt.s32.f32 %v1372
    %v1501 = vcvt.s32.f32 %v1373
    %v1502 = vcvt.s32.f32 %v1374
    %v1503 = vcvt.s32.f32 %v1375
    %v1504 = vcvt.s32.f32 %v1376
    %v1505 = vcvt.s32.f32 %v1377
    %v1506 = vcvt.s32.f32 %v1378
    %v1507 = vcvt.s32.f32 %v1379
    %v1508 = vcvt.s32.f32 %v1380
    %1509 = vadd.xlane.f32.xlu0 %v1381
    %v1510 = vpop.xlane.xlu0 %1509
    %1511 = vadd.xlane.f32.xlu0 %v1382
    %v1512 = vpop.xlane.xlu0 %1511
    %1513 = vadd.xlane.f32.xlu0 %v1383
    %v1514 = vpop.xlane.xlu0 %1513
    %1515 = vadd.xlane.f32.xlu0 %v1384
    %v1516 = vpop.xlane.xlu0 %1515
    %1517 = vadd.xlane.f32.xlu0 %v1385
    %v1518 = vpop.xlane.xlu0 %1517
    %1519 = vadd.xlane.f32.xlu0 %v1386
    %v1520 = vpop.xlane.xlu0 %1519
    %1521 = vadd.xlane.f32.xlu0 %v1387
    %v1522 = vpop.xlane.xlu0 %1521
    %1523 = vadd.xlane.f32.xlu0 %v1388
    %v1524 = vpop.xlane.xlu0 %1523
    %1525 = vadd.xlane.f32.xlu0 %v1389
    %v1526 = vpop.xlane.xlu0 %1525
    %1527 = vadd.xlane.f32.xlu0 %v1390
    %v1528 = vpop.xlane.xlu0 %1527
    %1529 = vadd.xlane.f32.xlu0 %v1391
    %v1530 = vpop.xlane.xlu0 %1529
    %1531 = vadd.xlane.f32.xlu0 %v1392
    %v1532 = vpop.xlane.xlu0 %1531
    %1533 = vadd.xlane.f32.xlu0 %v1393
    %v1534 = vpop.xlane.xlu0 %1533
    %1535 = vadd.xlane.f32.xlu0 %v1394
    %v1536 = vpop.xlane.xlu0 %1535
    %1537 = vadd.xlane.f32.xlu0 %v1395
    %v1538 = vpop.xlane.xlu0 %1537
    %1539 = vadd.xlane.f32.xlu0 %v1396
    %v1540 = vpop.xlane.xlu0 %1539
    %1541 = vadd.xlane.f32.xlu0 %v1397
    %v1542 = vpop.xlane.xlu0 %1541
    %1543 = vadd.xlane.f32.xlu0 %v1398
    %v1544 = vpop.xlane.xlu0 %1543
    %1545 = vadd.xlane.f32.xlu0 %v1399
    %v1546 = vpop.xlane.xlu0 %1545
    %1547 = vadd.xlane.f32.xlu0 %v1400
    %v1548 = vpop.xlane.xlu0 %1547
    %1549 = vadd.xlane.f32.xlu0 %v1401
    %v1550 = vpop.xlane.xlu0 %1549
    %1551 = vadd.xlane.f32.xlu0 %v1402
    %v1552 = vpop.xlane.xlu0 %1551
    %1553 = vadd.xlane.f32.xlu0 %v1403
    %v1554 = vpop.xlane.xlu0 %1553
    %1555 = vadd.xlane.f32.xlu0 %v1404
    %v1556 = vpop.xlane.xlu0 %1555
    %1557 = vadd.xlane.f32.xlu0 %v1405
    %v1558 = vpop.xlane.xlu0 %1557
    %1559 = vadd.xlane.f32.xlu0 %v1406
    %v1560 = vpop.xlane.xlu0 %1559
    %1561 = vadd.xlane.f32.xlu0 %v1407
    %v1562 = vpop.xlane.xlu0 %1561
    %1563 = vadd.xlane.f32.xlu0 %v1408
    %v1564 = vpop.xlane.xlu0 %1563
    %1565 = vadd.xlane.f32.xlu0 %v1409
    %v1566 = vpop.xlane.xlu0 %1565
    %1567 = vadd.xlane.f32.xlu0 %v1410
    %v1568 = vpop.xlane.xlu0 %1567
    %1569 = vadd.xlane.f32.xlu0 %v1411
    %v1570 = vpop.xlane.xlu0 %1569
    %1571 = vadd.xlane.f32.xlu0 %v1412
    %v1572 = vpop.xlane.xlu0 %1571
    %1573 = vadd.xlane.f32.xlu0 %v1413
    %v1574 = vpop.xlane.xlu0 %1573
    %1575 = vadd.xlane.f32.xlu0 %v1414
    %v1576 = vpop.xlane.xlu0 %1575
    %1577 = vadd.xlane.f32.xlu0 %v1415
    %v1578 = vpop.xlane.xlu0 %1577
    %1579 = vadd.xlane.f32.xlu0 %v1416
    %v1580 = vpop.xlane.xlu0 %1579
    %1581 = vadd.xlane.f32.xlu0 %v1417
    %v1582 = vpop.xlane.xlu0 %1581
    %1583 = vadd.xlane.f32.xlu0 %v1418
    %v1584 = vpop.xlane.xlu0 %1583
    %1585 = vadd.xlane.f32.xlu0 %v1419
    %v1586 = vpop.xlane.xlu0 %1585
    %1587 = vadd.xlane.f32.xlu0 %v1420
    %v1588 = vpop.xlane.xlu0 %1587
    %1589 = vadd.xlane.f32.xlu0 %v1421
    %v1590 = vpop.xlane.xlu0 %1589
    %1591 = vadd.xlane.f32.xlu0 %v1422
    %v1592 = vpop.xlane.xlu0 %1591
    %1593 = vadd.xlane.f32.xlu0 %v1423
    %v1594 = vpop.xlane.xlu0 %1593
    %1595 = vadd.xlane.f32.xlu0 %v1424
    %v1596 = vpop.xlane.xlu0 %1595
    %1597 = vadd.xlane.f32.xlu0 %v1425
    %v1598 = vpop.xlane.xlu0 %1597
    %1599 = vadd.xlane.f32.xlu0 %v1426
    %v1600 = vpop.xlane.xlu0 %1599
    %1601 = vadd.xlane.f32.xlu0 %v1427
    %v1602 = vpop.xlane.xlu0 %1601
    %1603 = vadd.xlane.f32.xlu0 %v1428
    %v1604 = vpop.xlane.xlu0 %1603
    %1605 = vadd.xlane.f32.xlu0 %v1429
    %v1606 = vpop.xlane.xlu0 %1605
    %1607 = vadd.xlane.f32.xlu0 %v1430
    %v1608 = vpop.xlane.xlu0 %1607
    %1609 = vadd.xlane.f32.xlu0 %v1431
    %v1610 = vpop.xlane.xlu0 %1609
    %1611 = vadd.xlane.f32.xlu0 %v1432
    %v1612 = vpop.xlane.xlu0 %1611
    %1613 = vadd.xlane.f32.xlu0 %v1433
    %v1614 = vpop.xlane.xlu0 %1613
    %1615 = vadd.xlane.f32.xlu0 %v1434
    %v1616 = vpop.xlane.xlu0 %1615
    %1617 = vadd.xlane.f32.xlu0 %v1435
    %v1618 = vpop.xlane.xlu0 %1617
    %1619 = vadd.xlane.f32.xlu0 %v1436
    %v1620 = vpop.xlane.xlu0 %1619
    %1621 = vadd.xlane.f32.xlu0 %v1437
    %v1622 = vpop.xlane.xlu0 %1621
    %1623 = vadd.xlane.f32.xlu0 %v1438
    %v1624 = vpop.xlane.xlu0 %1623
    %1625 = vadd.xlane.f32.xlu0 %v1439
    %v1626 = vpop.xlane.xlu0 %1625
    %1627 = vadd.xlane.f32.xlu0 %v1440
    %v1628 = vpop.xlane.xlu0 %1627
    %1629 = vadd.xlane.f32.xlu0 %v1441
    %v1630 = vpop.xlane.xlu0 %1629
    %1631 = vadd.xlane.f32.xlu0 %v1442
    %v1632 = vpop.xlane.xlu0 %1631
    %1633 = vadd.xlane.f32.xlu0 %v1443
    %v1634 = vpop.xlane.xlu0 %1633
    %1635 = vadd.xlane.f32.xlu0 %v1444
    %v1636 = vpop.xlane.xlu0 %1635
    %1637 = vadd.xlane.f32.xlu0 %v1445
    %v1638 = vpop.xlane.xlu0 %1637
    %1639 = vadd.xlane.f32.xlu0 %v1446
    %v1640 = vpop.xlane.xlu0 %1639
    %1641 = vadd.xlane.f32.xlu0 %v1447
    %v1642 = vpop.xlane.xlu0 %1641
    %1643 = vadd.xlane.f32.xlu0 %v1448
    %v1644 = vpop.xlane.xlu0 %1643
    %1645 = vadd.xlane.f32.xlu0 %v1449
    %v1646 = vpop.xlane.xlu0 %1645
    %1647 = vadd.xlane.f32.xlu0 %v1450
    %v1648 = vpop.xlane.xlu0 %1647
    %1649 = vadd.xlane.f32.xlu0 %v1451
    %v1650 = vpop.xlane.xlu0 %1649
    %1651 = vadd.xlane.f32.xlu0 %v1452
    %v1652 = vpop.xlane.xlu0 %1651
    %1653 = vadd.xlane.f32.xlu0 %v1453
    %v1654 = vpop.xlane.xlu0 %1653
    %1655 = vadd.xlane.f32.xlu0 %v1454
    %v1656 = vpop.xlane.xlu0 %1655
    %1657 = vadd.xlane.f32.xlu0 %v1455
    %v1658 = vpop.xlane.xlu0 %1657
    %1659 = vadd.xlane.f32.xlu0 %v1456
    %v1660 = vpop.xlane.xlu0 %1659
    %1661 = vadd.xlane.f32.xlu0 %v1457
    %v1662 = vpop.xlane.xlu0 %1661
    %1663 = vadd.xlane.f32.xlu0 %v1458
    %v1664 = vpop.xlane.xlu0 %1663
    %1665 = vadd.xlane.f32.xlu0 %v1459
    %v1666 = vpop.xlane.xlu0 %1665
    %1667 = vadd.xlane.f32.xlu0 %v1460
    %v1668 = vpop.xlane.xlu0 %1667
    %1669 = vadd.xlane.f32.xlu0 %v1461
    %v1670 = vpop.xlane.xlu0 %1669
    %1671 = vadd.xlane.f32.xlu0 %v1462
    %v1672 = vpop.xlane.xlu0 %1671
    %1673 = vadd.xlane.f32.xlu0 %v1463
    %v1674 = vpop.xlane.xlu0 %1673
    %1675 = vadd.xlane.f32.xlu0 %v1464
    %v1676 = vpop.xlane.xlu0 %1675
    %1677 = vadd.xlane.f32.xlu0 %v1465
    %v1678 = vpop.xlane.xlu0 %1677
    %1679 = vadd.xlane.f32.xlu0 %v1466
    %v1680 = vpop.xlane.xlu0 %1679
    %1681 = vadd.xlane.f32.xlu0 %v1467
    %v1682 = vpop.xlane.xlu0 %1681
    %1683 = vadd.xlane.f32.xlu0 %v1468
    %v1684 = vpop.xlane.xlu0 %1683
    %1685 = vadd.xlane.f32.xlu0 %v1469
    %v1686 = vpop.xlane.xlu0 %1685
    %1687 = vadd.xlane.f32.xlu0 %v1470
    %v1688 = vpop.xlane.xlu0 %1687
    %1689 = vadd.xlane.f32.xlu0 %v1471
    %v1690 = vpop.xlane.xlu0 %1689
    %1691 = vadd.xlane.f32.xlu0 %v1472
    %v1692 = vpop.xlane.xlu0 %1691
    %1693 = vadd.xlane.f32.xlu0 %v1473
    %v1694 = vpop.xlane.xlu0 %1693
    %1695 = vadd.xlane.f32.xlu0 %v1474
    %v1696 = vpop.xlane.xlu0 %1695
    %1697 = vadd.xlane.f32.xlu0 %v1475
    %v1698 = vpop.xlane.xlu0 %1697
    %1699 = vadd.xlane.f32.xlu0 %v1476
    %v1700 = vpop.xlane.xlu0 %1699
    %1701 = vadd.xlane.f32.xlu0 %v1477
    %v1702 = vpop.xlane.xlu0 %1701
    %1703 = vadd.xlane.f32.xlu0 %v1478
    %v1704 = vpop.xlane.xlu0 %1703
    %1705 = vadd.xlane.f32.xlu0 %v1479
    %v1706 = vpop.xlane.xlu0 %1705
    %1707 = vadd.xlane.f32.xlu0 %v1480
    %v1708 = vpop.xlane.xlu0 %1707
    %1709 = vadd.xlane.f32.xlu0 %v1481
    %v1710 = vpop.xlane.xlu0 %1709
    %1711 = vadd.xlane.f32.xlu0 %v1482
    %v1712 = vpop.xlane.xlu0 %1711
    %1713 = vadd.xlane.f32.xlu0 %v1483
    %v1714 = vpop.xlane.xlu0 %1713
    %1715 = vadd.xlane.f32.xlu0 %v1484
    %v1716 = vpop.xlane.xlu0 %1715
    %1717 = vadd.xlane.f32.xlu0 %v1485
    %v1718 = vpop.xlane.xlu0 %1717
    %1719 = vadd.xlane.f32.xlu0 %v1486
    %v1720 = vpop.xlane.xlu0 %1719
    %1721 = vadd.xlane.f32.xlu0 %v1487
    %v1722 = vpop.xlane.xlu0 %1721
    %1723 = vadd.xlane.f32.xlu0 %v1488
    %v1724 = vpop.xlane.xlu0 %1723
    %1725 = vadd.xlane.f32.xlu0 %v1489
    %v1726 = vpop.xlane.xlu0 %1725
    %1727 = vadd.xlane.f32.xlu0 %v1490
    %v1728 = vpop.xlane.xlu0 %1727
    %1729 = vadd.xlane.f32.xlu0 %v1491
    %v1730 = vpop.xlane.xlu0 %1729
    %1731 = vadd.xlane.f32.xlu0 %v1492
    %v1732 = vpop.xlane.xlu0 %1731
    %1733 = vadd.xlane.f32.xlu0 %v1493
    %v1734 = vpop.xlane.xlu0 %1733
    %1735 = vadd.xlane.f32.xlu0 %v1494
    %v1736 = vpop.xlane.xlu0 %1735
    %1737 = vadd.xlane.f32.xlu0 %v1495
    %v1738 = vpop.xlane.xlu0 %1737
    %1739 = vadd.xlane.f32.xlu0 %v1496
    %v1740 = vpop.xlane.xlu0 %1739
    %1741 = vadd.xlane.f32.xlu0 %v1497
    %v1742 = vpop.xlane.xlu0 %1741
    %1743 = vadd.xlane.f32.xlu0 %v1498
    %v1744 = vpop.xlane.xlu0 %1743
    %1745 = vadd.xlane.f32.xlu0 %v1499
    %v1746 = vpop.xlane.xlu0 %1745
    %1747 = vadd.xlane.f32.xlu0 %v1500
    %v1748 = vpop.xlane.xlu0 %1747
    %1749 = vadd.xlane.f32.xlu0 %v1501
    %v1750 = vpop.xlane.xlu0 %1749
    %1751 = vadd.xlane.f32.xlu0 %v1502
    %v1752 = vpop.xlane.xlu0 %1751
    %1753 = vadd.xlane.f32.xlu0 %v1503
    %v1754 = vpop.xlane.xlu0 %1753
    %1755 = vadd.xlane.f32.xlu0 %v1504
    %v1756 = vpop.xlane.xlu0 %1755
    %1757 = vadd.xlane.f32.xlu0 %v1505
    %v1758 = vpop.xlane.xlu0 %1757
    %1759 = vadd.xlane.f32.xlu0 %v1506
    %v1760 = vpop.xlane.xlu0 %1759
    %1761 = vadd.xlane.f32.xlu0 %v1507
    %v1762 = vpop.xlane.xlu0 %1761
    %1763 = vadd.xlane.f32.xlu0 %v1508
    %v1764 = vpop.xlane.xlu0 %1763
    %vm1765 = vcmp.le.f32.partialorder %v1510, %v42
    %vm1766 = vcmp.le.f32.partialorder %v1512, %v42
    %vm1767 = vcmp.le.f32.partialorder %v1514, %v42
    %vm1768 = vcmp.le.f32.partialorder %v1516, %v42
    %vm1769 = vcmp.le.f32.partialorder %v1518, %v42
    %vm1770 = vcmp.le.f32.partialorder %v1520, %v42
    %vm1771 = vcmp.le.f32.partialorder %v1522, %v42
    %vm1772 = vcmp.le.f32.partialorder %v1524, %v42
    %vm1773 = vcmp.le.f32.partialorder %v1526, %v42
    %vm1774 = vcmp.le.f32.partialorder %v1528, %v42
    %vm1775 = vcmp.le.f32.partialorder %v1530, %v42
    %vm1776 = vcmp.le.f32.partialorder %v1532, %v42
    %vm1777 = vcmp.le.f32.partialorder %v1534, %v42
    %vm1778 = vcmp.le.f32.partialorder %v1536, %v42
    %vm1779 = vcmp.le.f32.partialorder %v1538, %v42
    %vm1780 = vcmp.le.f32.partialorder %v1540, %v42
    %vm1781 = vcmp.le.f32.partialorder %v1542, %v42
    %vm1782 = vcmp.le.f32.partialorder %v1544, %v42
    %vm1783 = vcmp.le.f32.partialorder %v1546, %v42
    %vm1784 = vcmp.le.f32.partialorder %v1548, %v42
    %vm1785 = vcmp.le.f32.partialorder %v1550, %v42
    %vm1786 = vcmp.le.f32.partialorder %v1552, %v42
    %vm1787 = vcmp.le.f32.partialorder %v1554, %v42
    %vm1788 = vcmp.le.f32.partialorder %v1556, %v42
    %vm1789 = vcmp.le.f32.partialorder %v1558, %v42
    %vm1790 = vcmp.le.f32.partialorder %v1560, %v42
    %vm1791 = vcmp.le.f32.partialorder %v1562, %v42
    %vm1792 = vcmp.le.f32.partialorder %v1564, %v42
    %vm1793 = vcmp.le.f32.partialorder %v1566, %v42
    %vm1794 = vcmp.le.f32.partialorder %v1568, %v42
    %vm1795 = vcmp.le.f32.partialorder %v1570, %v42
    %vm1796 = vcmp.le.f32.partialorder %v1572, %v42
    %vm1797 = vcmp.le.f32.partialorder %v1574, %v42
    %vm1798 = vcmp.le.f32.partialorder %v1576, %v42
    %vm1799 = vcmp.le.f32.partialorder %v1578, %v42
    %vm1800 = vcmp.le.f32.partialorder %v1580, %v42
    %vm1801 = vcmp.le.f32.partialorder %v1582, %v42
    %vm1802 = vcmp.le.f32.partialorder %v1584, %v42
    %vm1803 = vcmp.le.f32.partialorder %v1586, %v42
    %vm1804 = vcmp.le.f32.partialorder %v1588, %v42
    %vm1805 = vcmp.le.f32.partialorder %v1590, %v42
    %vm1806 = vcmp.le.f32.partialorder %v1592, %v42
    %vm1807 = vcmp.le.f32.partialorder %v1594, %v42
    %vm1808 = vcmp.le.f32.partialorder %v1596, %v42
    %vm1809 = vcmp.le.f32.partialorder %v1598, %v42
    %vm1810 = vcmp.le.f32.partialorder %v1600, %v42
    %vm1811 = vcmp.le.f32.partialorder %v1602, %v42
    %vm1812 = vcmp.le.f32.partialorder %v1604, %v42
    %vm1813 = vcmp.le.f32.partialorder %v1606, %v42
    %vm1814 = vcmp.le.f32.partialorder %v1608, %v42
    %vm1815 = vcmp.le.f32.partialorder %v1610, %v42
    %vm1816 = vcmp.le.f32.partialorder %v1612, %v42
    %vm1817 = vcmp.le.f32.partialorder %v1614, %v42
    %vm1818 = vcmp.le.f32.partialorder %v1616, %v42
    %vm1819 = vcmp.le.f32.partialorder %v1618, %v42
    %vm1820 = vcmp.le.f32.partialorder %v1620, %v42
    %vm1821 = vcmp.le.f32.partialorder %v1622, %v42
    %vm1822 = vcmp.le.f32.partialorder %v1624, %v42
    %vm1823 = vcmp.le.f32.partialorder %v1626, %v42
    %vm1824 = vcmp.le.f32.partialorder %v1628, %v42
    %vm1825 = vcmp.le.f32.partialorder %v1630, %v42
    %vm1826 = vcmp.le.f32.partialorder %v1632, %v42
    %vm1827 = vcmp.le.f32.partialorder %v1634, %v42
    %vm1828 = vcmp.le.f32.partialorder %v1636, %v42
    %vm1829 = vcmp.le.f32.partialorder %v1638, %v42
    %vm1830 = vcmp.le.f32.partialorder %v1640, %v42
    %vm1831 = vcmp.le.f32.partialorder %v1642, %v42
    %vm1832 = vcmp.le.f32.partialorder %v1644, %v42
    %vm1833 = vcmp.le.f32.partialorder %v1646, %v42
    %vm1834 = vcmp.le.f32.partialorder %v1648, %v42
    %vm1835 = vcmp.le.f32.partialorder %v1650, %v42
    %vm1836 = vcmp.le.f32.partialorder %v1652, %v42
    %vm1837 = vcmp.le.f32.partialorder %v1654, %v42
    %vm1838 = vcmp.le.f32.partialorder %v1656, %v42
    %vm1839 = vcmp.le.f32.partialorder %v1658, %v42
    %vm1840 = vcmp.le.f32.partialorder %v1660, %v42
    %vm1841 = vcmp.le.f32.partialorder %v1662, %v42
    %vm1842 = vcmp.le.f32.partialorder %v1664, %v42
    %vm1843 = vcmp.le.f32.partialorder %v1666, %v42
    %vm1844 = vcmp.le.f32.partialorder %v1668, %v42
    %vm1845 = vcmp.le.f32.partialorder %v1670, %v42
    %vm1846 = vcmp.le.f32.partialorder %v1672, %v42
    %vm1847 = vcmp.le.f32.partialorder %v1674, %v42
    %vm1848 = vcmp.le.f32.partialorder %v1676, %v42
    %vm1849 = vcmp.le.f32.partialorder %v1678, %v42
    %vm1850 = vcmp.le.f32.partialorder %v1680, %v42
    %vm1851 = vcmp.le.f32.partialorder %v1682, %v42
    %vm1852 = vcmp.le.f32.partialorder %v1684, %v42
    %vm1853 = vcmp.le.f32.partialorder %v1686, %v42
    %vm1854 = vcmp.le.f32.partialorder %v1688, %v42
    %vm1855 = vcmp.le.f32.partialorder %v1690, %v42
    %vm1856 = vcmp.le.f32.partialorder %v1692, %v42
    %vm1857 = vcmp.le.f32.partialorder %v1694, %v42
    %vm1858 = vcmp.le.f32.partialorder %v1696, %v42
    %vm1859 = vcmp.le.f32.partialorder %v1698, %v42
    %vm1860 = vcmp.le.f32.partialorder %v1700, %v42
    %vm1861 = vcmp.le.f32.partialorder %v1702, %v42
    %vm1862 = vcmp.le.f32.partialorder %v1704, %v42
    %vm1863 = vcmp.le.f32.partialorder %v1706, %v42
    %vm1864 = vcmp.le.f32.partialorder %v1708, %v42
    %vm1865 = vcmp.le.f32.partialorder %v1710, %v42
    %vm1866 = vcmp.le.f32.partialorder %v1712, %v42
    %vm1867 = vcmp.le.f32.partialorder %v1714, %v42
    %vm1868 = vcmp.le.f32.partialorder %v1716, %v42
    %vm1869 = vcmp.le.f32.partialorder %v1718, %v42
    %vm1870 = vcmp.le.f32.partialorder %v1720, %v42
    %vm1871 = vcmp.le.f32.partialorder %v1722, %v42
    %vm1872 = vcmp.le.f32.partialorder %v1724, %v42
    %vm1873 = vcmp.le.f32.partialorder %v1726, %v42
    %vm1874 = vcmp.le.f32.partialorder %v1728, %v42
    %vm1875 = vcmp.le.f32.partialorder %v1730, %v42
    %vm1876 = vcmp.le.f32.partialorder %v1732, %v42
    %vm1877 = vcmp.le.f32.partialorder %v1734, %v42
    %vm1878 = vcmp.le.f32.partialorder %v1736, %v42
    %vm1879 = vcmp.le.f32.partialorder %v1738, %v42
    %vm1880 = vcmp.le.f32.partialorder %v1740, %v42
    %vm1881 = vcmp.le.f32.partialorder %v1742, %v42
    %vm1882 = vcmp.le.f32.partialorder %v1744, %v42
    %vm1883 = vcmp.le.f32.partialorder %v1746, %v42
    %vm1884 = vcmp.le.f32.partialorder %v1748, %v42
    %vm1885 = vcmp.le.f32.partialorder %v1750, %v42
    %vm1886 = vcmp.le.f32.partialorder %v1752, %v42
    %vm1887 = vcmp.le.f32.partialorder %v1754, %v42
    %vm1888 = vcmp.le.f32.partialorder %v1756, %v42
    %vm1889 = vcmp.le.f32.partialorder %v1758, %v42
    %vm1890 = vcmp.le.f32.partialorder %v1760, %v42
    %vm1891 = vcmp.le.f32.partialorder %v1762, %v42
    %vm1892 = vcmp.le.f32.partialorder %v1764, %v42
    %v1893 = vsel %vm1765, 1, 0
    %v1894 = vsel %vm1766, 1, 0
    %v1895 = vsel %vm1767, 1, 0
    %v1896 = vsel %vm1768, 1, 0
    %v1897 = vsel %vm1769, 1, 0
    %v1898 = vsel %vm1770, 1, 0
    %v1899 = vsel %vm1771, 1, 0
    %v1900 = vsel %vm1772, 1, 0
    %v1901 = vsel %vm1773, 1, 0
    %v1902 = vsel %vm1774, 1, 0
    %v1903 = vsel %vm1775, 1, 0
    %v1904 = vsel %vm1776, 1, 0
    %v1905 = vsel %vm1777, 1, 0
    %v1906 = vsel %vm1778, 1, 0
    %v1907 = vsel %vm1779, 1, 0
    %v1908 = vsel %vm1780, 1, 0
    %v1909 = vsel %vm1781, 1, 0
    %v1910 = vsel %vm1782, 1, 0
    %v1911 = vsel %vm1783, 1, 0
    %v1912 = vsel %vm1784, 1, 0
    %v1913 = vsel %vm1785, 1, 0
    %v1914 = vsel %vm1786, 1, 0
    %v1915 = vsel %vm1787, 1, 0
    %v1916 = vsel %vm1788, 1, 0
    %v1917 = vsel %vm1789, 1, 0
    %v1918 = vsel %vm1790, 1, 0
    %v1919 = vsel %vm1791, 1, 0
    %v1920 = vsel %vm1792, 1, 0
    %v1921 = vsel %vm1793, 1, 0
    %v1922 = vsel %vm1794, 1, 0
    %v1923 = vsel %vm1795, 1, 0
    %v1924 = vsel %vm1796, 1, 0
    %v1925 = vsel %vm1797, 1, 0
    %v1926 = vsel %vm1798, 1, 0
    %v1927 = vsel %vm1799, 1, 0
    %v1928 = vsel %vm1800, 1, 0
    %v1929 = vsel %vm1801, 1, 0
    %v1930 = vsel %vm1802, 1, 0
    %v1931 = vsel %vm1803, 1, 0
    %v1932 = vsel %vm1804, 1, 0
    %v1933 = vsel %vm1805, 1, 0
    %v1934 = vsel %vm1806, 1, 0
    %v1935 = vsel %vm1807, 1, 0
    %v1936 = vsel %vm1808, 1, 0
    %v1937 = vsel %vm1809, 1, 0
    %v1938 = vsel %vm1810, 1, 0
    %v1939 = vsel %vm1811, 1, 0
    %v1940 = vsel %vm1812, 1, 0
    %v1941 = vsel %vm1813, 1, 0
    %v1942 = vsel %vm1814, 1, 0
    %v1943 = vsel %vm1815, 1, 0
    %v1944 = vsel %vm1816, 1, 0
    %v1945 = vsel %vm1817, 1, 0
    %v1946 = vsel %vm1818, 1, 0
    %v1947 = vsel %vm1819, 1, 0
    %v1948 = vsel %vm1820, 1, 0
    %v1949 = vsel %vm1821, 1, 0
    %v1950 = vsel %vm1822, 1, 0
    %v1951 = vsel %vm1823, 1, 0
    %v1952 = vsel %vm1824, 1, 0
    %v1953 = vsel %vm1825, 1, 0
    %v1954 = vsel %vm1826, 1, 0
    %v1955 = vsel %vm1827, 1, 0
    %v1956 = vsel %vm1828, 1, 0
    %v1957 = vsel %vm1829, 1, 0
    %v1958 = vsel %vm1830, 1, 0
    %v1959 = vsel %vm1831, 1, 0
    %v1960 = vsel %vm1832, 1, 0
    %v1961 = vsel %vm1833, 1, 0
    %v1962 = vsel %vm1834, 1, 0
    %v1963 = vsel %vm1835, 1, 0
    %v1964 = vsel %vm1836, 1, 0
    %v1965 = vsel %vm1837, 1, 0
    %v1966 = vsel %vm1838, 1, 0
    %v1967 = vsel %vm1839, 1, 0
    %v1968 = vsel %vm1840, 1, 0
    %v1969 = vsel %vm1841, 1, 0
    %v1970 = vsel %vm1842, 1, 0
    %v1971 = vsel %vm1843, 1, 0
    %v1972 = vsel %vm1844, 1, 0
    %v1973 = vsel %vm1845, 1, 0
    %v1974 = vsel %vm1846, 1, 0
    %v1975 = vsel %vm1847, 1, 0
    %v1976 = vsel %vm1848, 1, 0
    %v1977 = vsel %vm1849, 1, 0
    %v1978 = vsel %vm1850, 1, 0
    %v1979 = vsel %vm1851, 1, 0
    %v1980 = vsel %vm1852, 1, 0
    %v1981 = vsel %vm1853, 1, 0
    %v1982 = vsel %vm1854, 1, 0
    %v1983 = vsel %vm1855, 1, 0
    %v1984 = vsel %vm1856, 1, 0
    %v1985 = vsel %vm1857, 1, 0
    %v1986 = vsel %vm1858, 1, 0
    %v1987 = vsel %vm1859, 1, 0
    %v1988 = vsel %vm1860, 1, 0
    %v1989 = vsel %vm1861, 1, 0
    %v1990 = vsel %vm1862, 1, 0
    %v1991 = vsel %vm1863, 1, 0
    %v1992 = vsel %vm1864, 1, 0
    %v1993 = vsel %vm1865, 1, 0
    %v1994 = vsel %vm1866, 1, 0
    %v1995 = vsel %vm1867, 1, 0
    %v1996 = vsel %vm1868, 1, 0
    %v1997 = vsel %vm1869, 1, 0
    %v1998 = vsel %vm1870, 1, 0
    %v1999 = vsel %vm1871, 1, 0
    %v2000 = vsel %vm1872, 1, 0
    %v2001 = vsel %vm1873, 1, 0
    %v2002 = vsel %vm1874, 1, 0
    %v2003 = vsel %vm1875, 1, 0
    %v2004 = vsel %vm1876, 1, 0
    %v2005 = vsel %vm1877, 1, 0
    %v2006 = vsel %vm1878, 1, 0
    %v2007 = vsel %vm1879, 1, 0
    %v2008 = vsel %vm1880, 1, 0
    %v2009 = vsel %vm1881, 1, 0
    %v2010 = vsel %vm1882, 1, 0
    %v2011 = vsel %vm1883, 1, 0
    %v2012 = vsel %vm1884, 1, 0
    %v2013 = vsel %vm1885, 1, 0
    %v2014 = vsel %vm1886, 1, 0
    %v2015 = vsel %vm1887, 1, 0
    %v2016 = vsel %vm1888, 1, 0
    %v2017 = vsel %vm1889, 1, 0
    %v2018 = vsel %vm1890, 1, 0
    %v2019 = vsel %vm1891, 1, 0
    %v2020 = vsel %vm1892, 1, 0
    %v2021 = vcvt.s32.f32 %v1893
    %v2022 = vcvt.s32.f32 %v1894
    %v2023 = vcvt.s32.f32 %v1895
    %v2024 = vcvt.s32.f32 %v1896
    %v2025 = vcvt.s32.f32 %v1897
    %v2026 = vcvt.s32.f32 %v1898
    %v2027 = vcvt.s32.f32 %v1899
    %v2028 = vcvt.s32.f32 %v1900
    %v2029 = vcvt.s32.f32 %v1901
    %v2030 = vcvt.s32.f32 %v1902
    %v2031 = vcvt.s32.f32 %v1903
    %v2032 = vcvt.s32.f32 %v1904
    %v2033 = vcvt.s32.f32 %v1905
    %v2034 = vcvt.s32.f32 %v1906
    %v2035 = vcvt.s32.f32 %v1907
    %v2036 = vcvt.s32.f32 %v1908
    %v2037 = vcvt.s32.f32 %v1909
    %v2038 = vcvt.s32.f32 %v1910
    %v2039 = vcvt.s32.f32 %v1911
    %v2040 = vcvt.s32.f32 %v1912
    %v2041 = vcvt.s32.f32 %v1913
    %v2042 = vcvt.s32.f32 %v1914
    %v2043 = vcvt.s32.f32 %v1915
    %v2044 = vcvt.s32.f32 %v1916
    %v2045 = vcvt.s32.f32 %v1917
    %v2046 = vcvt.s32.f32 %v1918
    %v2047 = vcvt.s32.f32 %v1919
    %v2048 = vcvt.s32.f32 %v1920
    %v2049 = vcvt.s32.f32 %v1921
    %v2050 = vcvt.s32.f32 %v1922
    %v2051 = vcvt.s32.f32 %v1923
    %v2052 = vcvt.s32.f32 %v1924
    %v2053 = vcvt.s32.f32 %v1925
    %v2054 = vcvt.s32.f32 %v1926
    %v2055 = vcvt.s32.f32 %v1927
    %v2056 = vcvt.s32.f32 %v1928
    %v2057 = vcvt.s32.f32 %v1929
    %v2058 = vcvt.s32.f32 %v1930
    %v2059 = vcvt.s32.f32 %v1931
    %v2060 = vcvt.s32.f32 %v1932
    %v2061 = vcvt.s32.f32 %v1933
    %v2062 = vcvt.s32.f32 %v1934
    %v2063 = vcvt.s32.f32 %v1935
    %v2064 = vcvt.s32.f32 %v1936
    %v2065 = vcvt.s32.f32 %v1937
    %v2066 = vcvt.s32.f32 %v1938
    %v2067 = vcvt.s32.f32 %v1939
    %v2068 = vcvt.s32.f32 %v1940
    %v2069 = vcvt.s32.f32 %v1941
    %v2070 = vcvt.s32.f32 %v1942
    %v2071 = vcvt.s32.f32 %v1943
    %v2072 = vcvt.s32.f32 %v1944
    %v2073 = vcvt.s32.f32 %v1945
    %v2074 = vcvt.s32.f32 %v1946
    %v2075 = vcvt.s32.f32 %v1947
    %v2076 = vcvt.s32.f32 %v1948
    %v2077 = vcvt.s32.f32 %v1949
    %v2078 = vcvt.s32.f32 %v1950
    %v2079 = vcvt.s32.f32 %v1951
    %v2080 = vcvt.s32.f32 %v1952
    %v2081 = vcvt.s32.f32 %v1953
    %v2082 = vcvt.s32.f32 %v1954
    %v2083 = vcvt.s32.f32 %v1955
    %v2084 = vcvt.s32.f32 %v1956
    %v2085 = vcvt.s32.f32 %v1957
    %v2086 = vcvt.s32.f32 %v1958
    %v2087 = vcvt.s32.f32 %v1959
    %v2088 = vcvt.s32.f32 %v1960
    %v2089 = vcvt.s32.f32 %v1961
    %v2090 = vcvt.s32.f32 %v1962
    %v2091 = vcvt.s32.f32 %v1963
    %v2092 = vcvt.s32.f32 %v1964
    %v2093 = vcvt.s32.f32 %v1965
    %v2094 = vcvt.s32.f32 %v1966
    %v2095 = vcvt.s32.f32 %v1967
    %v2096 = vcvt.s32.f32 %v1968
    %v2097 = vcvt.s32.f32 %v1969
    %v2098 = vcvt.s32.f32 %v1970
    %v2099 = vcvt.s32.f32 %v1971
    %v2100 = vcvt.s32.f32 %v1972
    %v2101 = vcvt.s32.f32 %v1973
    %v2102 = vcvt.s32.f32 %v1974
    %v2103 = vcvt.s32.f32 %v1975
    %v2104 = vcvt.s32.f32 %v1976
    %v2105 = vcvt.s32.f32 %v1977
    %v2106 = vcvt.s32.f32 %v1978
    %v2107 = vcvt.s32.f32 %v1979
    %v2108 = vcvt.s32.f32 %v1980
    %v2109 = vcvt.s32.f32 %v1981
    %v2110 = vcvt.s32.f32 %v1982
    %v2111 = vcvt.s32.f32 %v1983
    %v2112 = vcvt.s32.f32 %v1984
    %v2113 = vcvt.s32.f32 %v1985
    %v2114 = vcvt.s32.f32 %v1986
    %v2115 = vcvt.s32.f32 %v1987
    %v2116 = vcvt.s32.f32 %v1988
    %v2117 = vcvt.s32.f32 %v1989
    %v2118 = vcvt.s32.f32 %v1990
    %v2119 = vcvt.s32.f32 %v1991
    %v2120 = vcvt.s32.f32 %v1992
    %v2121 = vcvt.s32.f32 %v1993
    %v2122 = vcvt.s32.f32 %v1994
    %v2123 = vcvt.s32.f32 %v1995
    %v2124 = vcvt.s32.f32 %v1996
    %v2125 = vcvt.s32.f32 %v1997
    %v2126 = vcvt.s32.f32 %v1998
    %v2127 = vcvt.s32.f32 %v1999
    %v2128 = vcvt.s32.f32 %v2000
    %v2129 = vcvt.s32.f32 %v2001
    %v2130 = vcvt.s32.f32 %v2002
    %v2131 = vcvt.s32.f32 %v2003
    %v2132 = vcvt.s32.f32 %v2004
    %v2133 = vcvt.s32.f32 %v2005
    %v2134 = vcvt.s32.f32 %v2006
    %v2135 = vcvt.s32.f32 %v2007
    %v2136 = vcvt.s32.f32 %v2008
    %v2137 = vcvt.s32.f32 %v2009
    %v2138 = vcvt.s32.f32 %v2010
    %v2139 = vcvt.s32.f32 %v2011
    %v2140 = vcvt.s32.f32 %v2012
    %v2141 = vcvt.s32.f32 %v2013
    %v2142 = vcvt.s32.f32 %v2014
    %v2143 = vcvt.s32.f32 %v2015
    %v2144 = vcvt.s32.f32 %v2016
    %v2145 = vcvt.s32.f32 %v2017
    %v2146 = vcvt.s32.f32 %v2018
    %v2147 = vcvt.s32.f32 %v2019
    %v2148 = vcvt.s32.f32 %v2020
    %v2149 = vsel %vm44, %v49, 0.0
    %v2150 = vlaneseq
    %v2151 = vshrl.u32 %v2150, 7
    %vm2152 = vcmp.eq.s32.totalorder %v2151, 0
    %v2154 = vcombine.high %v2149, %v2149
    %v2156 = vunpack.c.l.s4 1966171168
    %v2157 = vunpack.c.0.s8 %v2156
    %v2158 = vlaneseq
    %v2159 = vshrl.u32 %v2158, 7
    %v2160 = vsub.s32 %v2157, %v2159
    %v2161 = vrot.slane %v2149, %v2160
    %v2163 = vunpack.c.l.s4 1966171168
    %v2164 = vunpack.c.0.s8 %v2163
    %v2165 = vlaneseq
    %v2166 = vshrl.u32 %v2165, 7
    %v2167 = vsub.s32 %v2164, %v2166
    %v2168 = vrot.slane %v2154, %v2167
    %v2169 = vcombine.high %v2161, %v2161
    %v2170 = vcombine.high %v2168, %v2168
    %v2172 = vunpack.c.l.s4 1966171168
    %v2173 = vunpack.c.0.s8 %v2172
    %v2174 = vlaneseq
    %v2175 = vshrl.u32 %v2174, 7
    %v2176 = vsub.s32 %v2173, %v2175
    %v2177 = vrot.slane %v2161, %v2176
    %v2179 = vunpack.c.l.s4 1966171168
    %v2180 = vunpack.c.0.s8 %v2179
    %v2181 = vlaneseq
    %v2182 = vshrl.u32 %v2181, 7
    %v2183 = vsub.s32 %v2180, %v2182
    %v2184 = vrot.slane %v2168, %v2183
    %v2186 = vunpack.c.l.s4 1966171168
    %v2187 = vunpack.c.0.s8 %v2186
    %v2188 = vlaneseq
    %v2189 = vshrl.u32 %v2188, 7
    %v2190 = vsub.s32 %v2187, %v2189
    %v2191 = vrot.slane %v2169, %v2190
    %v2193 = vunpack.c.l.s4 1966171168
    %v2194 = vunpack.c.0.s8 %v2193
    %v2195 = vlaneseq
    %v2196 = vshrl.u32 %v2195, 7
    %v2197 = vsub.s32 %v2194, %v2196
    %v2198 = vrot.slane %v2170, %v2197
    %v2199 = vcombine.high %v2177, %v2177
    %v2200 = vcombine.high %v2184, %v2184
    %v2201 = vcombine.high %v2191, %v2191
    %v2202 = vcombine.high %v2198, %v2198
    %v2203 = vmul.f32 %v2149, %v2149
    %v2205 = vcombine.high %v2203, %v2203
    %v2207 = vunpack.c.l.s4 1966171168
    %v2208 = vunpack.c.0.s8 %v2207
    %v2209 = vlaneseq
    %v2210 = vshrl.u32 %v2209, 7
    %v2211 = vsub.s32 %v2208, %v2210
    %v2212 = vrot.slane %v2203, %v2211
    %v2214 = vunpack.c.l.s4 1966171168
    %v2215 = vunpack.c.0.s8 %v2214
    %v2216 = vlaneseq
    %v2217 = vshrl.u32 %v2216, 7
    %v2218 = vsub.s32 %v2215, %v2217
    %v2219 = vrot.slane %v2205, %v2218
    %v2220 = vcombine.high %v2212, %v2212
    %v2221 = vcombine.high %v2219, %v2219
    %v2223 = vunpack.c.l.s4 1966171168
    %v2224 = vunpack.c.0.s8 %v2223
    %v2225 = vlaneseq
    %v2226 = vshrl.u32 %v2225, 7
    %v2227 = vsub.s32 %v2224, %v2226
    %v2228 = vrot.slane %v2212, %v2227
    %v2230 = vunpack.c.l.s4 1966171168
    %v2231 = vunpack.c.0.s8 %v2230
    %v2232 = vlaneseq
    %v2233 = vshrl.u32 %v2232, 7
    %v2234 = vsub.s32 %v2231, %v2233
    %v2235 = vrot.slane %v2219, %v2234
    %v2237 = vunpack.c.l.s4 1966171168
    %v2238 = vunpack.c.0.s8 %v2237
    %v2239 = vlaneseq
    %v2240 = vshrl.u32 %v2239, 7
    %v2241 = vsub.s32 %v2238, %v2240
    %v2242 = vrot.slane %v2220, %v2241
    %v2244 = vunpack.c.l.s4 1966171168
    %v2245 = vunpack.c.0.s8 %v2244
    %v2246 = vlaneseq
    %v2247 = vshrl.u32 %v2246, 7
    %v2248 = vsub.s32 %v2245, %v2247
    %v2249 = vrot.slane %v2221, %v2248
    %v2250 = vcombine.high %v2228, %v2228
    %v2251 = vcombine.high %v2235, %v2235
    %v2252 = vcombine.high %v2242, %v2242
    %v2253 = vcombine.high %v2249, %v2249
    %v2254 = vsel %vm2152, 1, 0
    %vm2255 = vcmp.eq.s32.totalorder %v2254, 1
    %v2256 = vlaneseq
    %v2257 = vshrl.u32 %v2256, 7
    %v2258 = vsub.s32 0, %v2257
    %v2259 = vrot.slane %v2177, %v2258
    %v2260 = vlaneseq
    %v2261 = vshrl.u32 %v2260, 7
    %v2262 = vsub.s32 0, %v2261
    %v2263 = vrot.slane %v2191, %v2262
    %v2264 = vlaneseq
    %v2265 = vshrl.u32 %v2264, 7
    %v2266 = vsub.s32 0, %v2265
    %v2267 = vrot.slane %v2199, %v2266
    %v2268 = vlaneseq
    %v2269 = vshrl.u32 %v2268, 7
    %v2270 = vsub.s32 0, %v2269
    %v2271 = vrot.slane %v2201, %v2270
    %v2272 = vlaneseq
    %v2273 = vshrl.u32 %v2272, 7
    %v2274 = vsub.s32 0, %v2273
    %v2275 = vrot.slane %v2184, %v2274
    %v2276 = vlaneseq
    %v2277 = vshrl.u32 %v2276, 7
    %v2278 = vsub.s32 0, %v2277
    %v2279 = vrot.slane %v2198, %v2278
    %v2280 = vlaneseq
    %v2281 = vshrl.u32 %v2280, 7
    %v2282 = vsub.s32 0, %v2281
    %v2283 = vrot.slane %v2200, %v2282
    %v2284 = vlaneseq
    %v2285 = vshrl.u32 %v2284, 7
    %v2286 = vsub.s32 0, %v2285
    %v2287 = vrot.slane %v2202, %v2286
    %v2296 = vlaneseq
    %v2297 = vshrl.u32 %v2296, 7
    %v2298 = vsub.s32 0, %v2297
    %v2299 = vrot.slane %v2228, %v2298
    %v2300 = vlaneseq
    %v2301 = vshrl.u32 %v2300, 7
    %v2302 = vsub.s32 0, %v2301
    %v2303 = vrot.slane %v2242, %v2302
    %v2304 = vlaneseq
    %v2305 = vshrl.u32 %v2304, 7
    %v2306 = vsub.s32 0, %v2305
    %v2307 = vrot.slane %v2250, %v2306
    %v2308 = vlaneseq
    %v2309 = vshrl.u32 %v2308, 7
    %v2310 = vsub.s32 0, %v2309
    %v2311 = vrot.slane %v2252, %v2310
    %v2312 = vlaneseq
    %v2313 = vshrl.u32 %v2312, 7
    %v2314 = vsub.s32 0, %v2313
    %v2315 = vrot.slane %v2235, %v2314
    %v2316 = vlaneseq
    %v2317 = vshrl.u32 %v2316, 7
    %v2318 = vsub.s32 0, %v2317
    %v2319 = vrot.slane %v2249, %v2318
    %v2320 = vlaneseq
    %v2321 = vshrl.u32 %v2320, 7
    %v2322 = vsub.s32 0, %v2321
    %v2323 = vrot.slane %v2251, %v2322
    %v2324 = vlaneseq
    %v2325 = vshrl.u32 %v2324, 7
    %v2326 = vsub.s32 0, %v2325
    %v2327 = vrot.slane %v2253, %v2326
    %v2336 = vsel %vm2255, %v2259, %v2299
    %v2337 = vsel %vm2255, %v2263, %v2303
    %v2338 = vsel %vm2255, %v2267, %v2307
    %v2339 = vsel %vm2255, %v2271, %v2311
    %v2340 = vsel %vm2255, %v2275, %v2315
    %v2341 = vsel %vm2255, %v2279, %v2319
    %v2342 = vsel %vm2255, %v2283, %v2323
    %v2343 = vsel %vm2255, %v2287, %v2327
    %2344 = vmatprep.subr.mxu0 0.0
    %2345 = vmatpush1.msra.mxu0 %v2036
    %2346 = vmatprep.subr.mxu0 0.0
    %2347 = vmatpush1.msra.mxu0 %v2035
    %2348 = vmatprep.subr.mxu0 0.0
    %2349 = vmatpush1.msra.mxu0 %v2034
    %2350 = vmatprep.subr.mxu0 0.0
    %2351 = vmatpush1.msra.mxu0 %v2033
    %2352 = vmatprep.subr.mxu0 0.0
    %2353 = vmatpush1.msra.mxu0 %v2032
    %2354 = vmatprep.subr.mxu0 0.0
    %2355 = vmatpush1.msra.mxu0 %v2031
    %2356 = vmatprep.subr.mxu0 0.0
    %2357 = vmatpush1.msra.mxu0 %v2030
    %2358 = vmatprep.subr.mxu0 0.0
    %2359 = vmatpush1.msra.mxu0 %v2029
    %2360 = vmatprep.subr.mxu0 0.0
    %2361 = vmatpush1.msra.mxu0 %v2028
    %2362 = vmatprep.subr.mxu0 0.0
    %2363 = vmatpush1.msra.mxu0 %v2027
    %2364 = vmatprep.subr.mxu0 0.0
    %2365 = vmatpush1.msra.mxu0 %v2026
    %2366 = vmatprep.subr.mxu0 0.0
    %2367 = vmatpush1.msra.mxu0 %v2025
    %2368 = vmatprep.subr.mxu0 0.0
    %2369 = vmatpush1.msra.mxu0 %v2024
    %2370 = vmatprep.subr.mxu0 0.0
    %2371 = vmatpush1.msra.mxu0 %v2023
    %2372 = vmatprep.subr.mxu0 0.0
    %2373 = vmatpush1.msra.mxu0 %v2022
    %2374 = vmatprep.subr.mxu0 0.0
    %2375 = vmatpush1.msra.mxu0 %v2021
    %2376 = vmatprep.subr.mxu0 0.0
    %2377 = vmatpush2.msra.mxu0 0.0
    %2378 = vmatprep.subr.mxu0 0.0
    %2379 = vmatpush2.msra.mxu0 0.0
    %2380 = vmatprep.subr.mxu0 0.0
    %2381 = vmatpush2.msra.mxu0 0.0
    %2382 = vmatprep.subr.mxu0 0.0
    %2383 = vmatpush2.msra.mxu0 0.0
    %2384 = vmatprep.subr.mxu0 0.0
    %2385 = vmatpush2.msra.mxu0 0.0
    %2386 = vmatprep.subr.mxu0 0.0
    %2387 = vmatpush2.msra.mxu0 0.0
    %2388 = vmatprep.subr.mxu0 0.0
    %2389 = vmatpush2.msra.mxu0 0.0
    %2390 = vmatprep.subr.mxu0 0.0
    %2391 = vmatpush2.msra.mxu0 0.0
    %2392 = vmatprep.subr.mxu0 0.0
    %2393 = vmatpush2.msra.mxu0 0.0
    %2394 = vmatprep.subr.mxu0 0.0
    %2395 = vmatpush2.msra.mxu0 0.0
    %2396 = vmatprep.subr.mxu0 0.0
    %2397 = vmatpush2.msra.mxu0 0.0
    %2398 = vmatprep.subr.mxu0 0.0
    %2399 = vmatpush2.msra.mxu0 0.0
    %2400 = vmatprep.subr.mxu0 0.0
    %2401 = vmatpush2.msra.mxu0 0.0
    %2402 = vmatprep.subr.mxu0 0.0
    %2403 = vmatpush2.msra.mxu0 0.0
    %2404 = vmatprep.subr.mxu0 0.0
    %2405 = vmatpush2.msra.mxu0 0.0
    %2406 = vmatprep.subr.mxu0 0.0
    %2407 = vmatpush2.msra.mxu0 0.0
    %2408 = vmatprep.mubr.f32.mxu0 0.0
    %2409 = vmatmul.mubr.f32.gmra.mxu0 %v2336
    %v2410 = vpop.f32.mrf.mxu0
    %v2411 = vadd.f32 0.0, %v2410
    %v2412 = vpop.f32.mrf.mxu0
    %2413 = vdwg.mxu0
    %2414 = vmatprep.subr.mxu0 0.0
    %2415 = vmatpush1.msra.mxu0 %v2052
    %2416 = vmatprep.subr.mxu0 0.0
    %2417 = vmatpush1.msra.mxu0 %v2051
    %2418 = vmatprep.subr.mxu0 0.0
    %2419 = vmatpush1.msra.mxu0 %v2050
    %2420 = vmatprep.subr.mxu0 0.0
    %2421 = vmatpush1.msra.mxu0 %v2049
    %2422 = vmatprep.subr.mxu0 0.0
    %2423 = vmatpush1.msra.mxu0 %v2048
    %2424 = vmatprep.subr.mxu0 0.0
    %2425 = vmatpush1.msra.mxu0 %v2047
    %2426 = vmatprep.subr.mxu0 0.0
    %2427 = vmatpush1.msra.mxu0 %v2046
    %2428 = vmatprep.subr.mxu0 0.0
    %2429 = vmatpush1.msra.mxu0 %v2045
    %2430 = vmatprep.subr.mxu0 0.0
    %2431 = vmatpush1.msra.mxu0 %v2044
    %2432 = vmatprep.subr.mxu0 0.0
    %2433 = vmatpush1.msra.mxu0 %v2043
    %2434 = vmatprep.subr.mxu0 0.0
    %2435 = vmatpush1.msra.mxu0 %v2042
    %2436 = vmatprep.subr.mxu0 0.0
    %2437 = vmatpush1.msra.mxu0 %v2041
    %2438 = vmatprep.subr.mxu0 0.0
    %2439 = vmatpush1.msra.mxu0 %v2040
    %2440 = vmatprep.subr.mxu0 0.0
    %2441 = vmatpush1.msra.mxu0 %v2039
    %2442 = vmatprep.subr.mxu0 0.0
    %2443 = vmatpush1.msra.mxu0 %v2038
    %2444 = vmatprep.subr.mxu0 0.0
    %2445 = vmatpush1.msra.mxu0 %v2037
    %2446 = vmatprep.subr.mxu0 0.0
    %2447 = vmatpush2.msra.mxu0 0.0
    %2448 = vmatprep.subr.mxu0 0.0
    %2449 = vmatpush2.msra.mxu0 0.0
    %2450 = vmatprep.subr.mxu0 0.0
    %2451 = vmatpush2.msra.mxu0 0.0
    %2452 = vmatprep.subr.mxu0 0.0
    %2453 = vmatpush2.msra.mxu0 0.0
    %2454 = vmatprep.subr.mxu0 0.0
    %2455 = vmatpush2.msra.mxu0 0.0
    %2456 = vmatprep.subr.mxu0 0.0
    %2457 = vmatpush2.msra.mxu0 0.0
    %2458 = vmatprep.subr.mxu0 0.0
    %2459 = vmatpush2.msra.mxu0 0.0
    %2460 = vmatprep.subr.mxu0 0.0
    %2461 = vmatpush2.msra.mxu0 0.0
    %2462 = vmatprep.subr.mxu0 0.0
    %2463 = vmatpush2.msra.mxu0 0.0
    %2464 = vmatprep.subr.mxu0 0.0
    %2465 = vmatpush2.msra.mxu0 0.0
    %2466 = vmatprep.subr.mxu0 0.0
    %2467 = vmatpush2.msra.mxu0 0.0
    %2468 = vmatprep.subr.mxu0 0.0
    %2469 = vmatpush2.msra.mxu0 0.0
    %2470 = vmatprep.subr.mxu0 0.0
    %2471 = vmatpush2.msra.mxu0 0.0
    %2472 = vmatprep.subr.mxu0 0.0
    %2473 = vmatpush2.msra.mxu0 0.0
    %2474 = vmatprep.subr.mxu0 0.0
    %2475 = vmatpush2.msra.mxu0 0.0
    %2476 = vmatprep.subr.mxu0 0.0
    %2477 = vmatpush2.msra.mxu0 0.0
    %2478 = vmatprep.mubr.f32.mxu0 0.0
    %2479 = vmatmul.mubr.f32.gmra.mxu0 %v2337
    %v2480 = vpop.f32.mrf.mxu0
    %v2481 = vadd.f32 0.0, %v2480
    %v2482 = vpop.f32.mrf.mxu0
    %2483 = vdwg.mxu0
    %2484 = vmatprep.subr.mxu0 0.0
    %2485 = vmatpush1.msra.mxu0 %v2068
    %2486 = vmatprep.subr.mxu0 0.0
    %2487 = vmatpush1.msra.mxu0 %v2067
    %2488 = vmatprep.subr.mxu0 0.0
    %2489 = vmatpush1.msra.mxu0 %v2066
    %2490 = vmatprep.subr.mxu0 0.0
    %2491 = vmatpush1.msra.mxu0 %v2065
    %2492 = vmatprep.subr.mxu0 0.0
    %2493 = vmatpush1.msra.mxu0 %v2064
    %2494 = vmatprep.subr.mxu0 0.0
    %2495 = vmatpush1.msra.mxu0 %v2063
    %2496 = vmatprep.subr.mxu0 0.0
    %2497 = vmatpush1.msra.mxu0 %v2062
    %2498 = vmatprep.subr.mxu0 0.0
    %2499 = vmatpush1.msra.mxu0 %v2061
    %2500 = vmatprep.subr.mxu0 0.0
    %2501 = vmatpush1.msra.mxu0 %v2060
    %2502 = vmatprep.subr.mxu0 0.0
    %2503 = vmatpush1.msra.mxu0 %v2059
    %2504 = vmatprep.subr.mxu0 0.0
    %2505 = vmatpush1.msra.mxu0 %v2058
    %2506 = vmatprep.subr.mxu0 0.0
    %2507 = vmatpush1.msra.mxu0 %v2057
    %2508 = vmatprep.subr.mxu0 0.0
    %2509 = vmatpush1.msra.mxu0 %v2056
    %2510 = vmatprep.subr.mxu0 0.0
    %2511 = vmatpush1.msra.mxu0 %v2055
    %2512 = vmatprep.subr.mxu0 0.0
    %2513 = vmatpush1.msra.mxu0 %v2054
    %2514 = vmatprep.subr.mxu0 0.0
    %2515 = vmatpush1.msra.mxu0 %v2053
    %2516 = vmatprep.subr.mxu0 0.0
    %2517 = vmatpush2.msra.mxu0 0.0
    %2518 = vmatprep.subr.mxu0 0.0
    %2519 = vmatpush2.msra.mxu0 0.0
    %2520 = vmatprep.subr.mxu0 0.0
    %2521 = vmatpush2.msra.mxu0 0.0
    %2522 = vmatprep.subr.mxu0 0.0
    %2523 = vmatpush2.msra.mxu0 0.0
    %2524 = vmatprep.subr.mxu0 0.0
    %2525 = vmatpush2.msra.mxu0 0.0
    %2526 = vmatprep.subr.mxu0 0.0
    %2527 = vmatpush2.msra.mxu0 0.0
    %2528 = vmatprep.subr.mxu0 0.0
    %2529 = vmatpush2.msra.mxu0 0.0
    %2530 = vmatprep.subr.mxu0 0.0
    %2531 = vmatpush2.msra.mxu0 0.0
    %2532 = vmatprep.subr.mxu0 0.0
    %2533 = vmatpush2.msra.mxu0 0.0
    %2534 = vmatprep.subr.mxu0 0.0
    %2535 = vmatpush2.msra.mxu0 0.0
    %2536 = vmatprep.subr.mxu0 0.0
    %2537 = vmatpush2.msra.mxu0 0.0
    %2538 = vmatprep.subr.mxu0 0.0
    %2539 = vmatpush2.msra.mxu0 0.0
    %2540 = vmatprep.subr.mxu0 0.0
    %2541 = vmatpush2.msra.mxu0 0.0
    %2542 = vmatprep.subr.mxu0 0.0
    %2543 = vmatpush2.msra.mxu0 0.0
    %2544 = vmatprep.subr.mxu0 0.0
    %2545 = vmatpush2.msra.mxu0 0.0
    %2546 = vmatprep.subr.mxu0 0.0
    %2547 = vmatpush2.msra.mxu0 0.0
    %2548 = vmatprep.mubr.f32.mxu0 0.0
    %2549 = vmatmul.mubr.f32.gmra.mxu0 %v2338
    %v2550 = vpop.f32.mrf.mxu0
    %v2551 = vadd.f32 0.0, %v2550
    %v2552 = vpop.f32.mrf.mxu0
    %2553 = vdwg.mxu0
    %2554 = vmatprep.subr.mxu0 0.0
    %2555 = vmatpush1.msra.mxu0 %v2084
    %2556 = vmatprep.subr.mxu0 0.0
    %2557 = vmatpush1.msra.mxu0 %v2083
    %2558 = vmatprep.subr.mxu0 0.0
    %2559 = vmatpush1.msra.mxu0 %v2082
    %2560 = vmatprep.subr.mxu0 0.0
    %2561 = vmatpush1.msra.mxu0 %v2081
    %2562 = vmatprep.subr.mxu0 0.0
    %2563 = vmatpush1.msra.mxu0 %v2080
    %2564 = vmatprep.subr.mxu0 0.0
    %2565 = vmatpush1.msra.mxu0 %v2079
    %2566 = vmatprep.subr.mxu0 0.0
    %2567 = vmatpush1.msra.mxu0 %v2078
    %2568 = vmatprep.subr.mxu0 0.0
    %2569 = vmatpush1.msra.mxu0 %v2077
    %2570 = vmatprep.subr.mxu0 0.0
    %2571 = vmatpush1.msra.mxu0 %v2076
    %2572 = vmatprep.subr.mxu0 0.0
    %2573 = vmatpush1.msra.mxu0 %v2075
    %2574 = vmatprep.subr.mxu0 0.0
    %2575 = vmatpush1.msra.mxu0 %v2074
    %2576 = vmatprep.subr.mxu0 0.0
    %2577 = vmatpush1.msra.mxu0 %v2073
    %2578 = vmatprep.subr.mxu0 0.0
    %2579 = vmatpush1.msra.mxu0 %v2072
    %2580 = vmatprep.subr.mxu0 0.0
    %2581 = vmatpush1.msra.mxu0 %v2071
    %2582 = vmatprep.subr.mxu0 0.0
    %2583 = vmatpush1.msra.mxu0 %v2070
    %2584 = vmatprep.subr.mxu0 0.0
    %2585 = vmatpush1.msra.mxu0 %v2069
    %2586 = vmatprep.subr.mxu0 0.0
    %2587 = vmatpush2.msra.mxu0 0.0
    %2588 = vmatprep.subr.mxu0 0.0
    %2589 = vmatpush2.msra.mxu0 0.0
    %2590 = vmatprep.subr.mxu0 0.0
    %2591 = vmatpush2.msra.mxu0 0.0
    %2592 = vmatprep.subr.mxu0 0.0
    %2593 = vmatpush2.msra.mxu0 0.0
    %2594 = vmatprep.subr.mxu0 0.0
    %2595 = vmatpush2.msra.mxu0 0.0
    %2596 = vmatprep.subr.mxu0 0.0
    %2597 = vmatpush2.msra.mxu0 0.0
    %2598 = vmatprep.subr.mxu0 0.0
    %2599 = vmatpush2.msra.mxu0 0.0
    %2600 = vmatprep.subr.mxu0 0.0
    %2601 = vmatpush2.msra.mxu0 0.0
    %2602 = vmatprep.subr.mxu0 0.0
    %2603 = vmatpush2.msra.mxu0 0.0
    %2604 = vmatprep.subr.mxu0 0.0
    %2605 = vmatpush2.msra.mxu0 0.0
    %2606 = vmatprep.subr.mxu0 0.0
    %2607 = vmatpush2.msra.mxu0 0.0
    %2608 = vmatprep.subr.mxu0 0.0
    %2609 = vmatpush2.msra.mxu0 0.0
    %2610 = vmatprep.subr.mxu0 0.0
    %2611 = vmatpush2.msra.mxu0 0.0
    %2612 = vmatprep.subr.mxu0 0.0
    %2613 = vmatpush2.msra.mxu0 0.0
    %2614 = vmatprep.subr.mxu0 0.0
    %2615 = vmatpush2.msra.mxu0 0.0
    %2616 = vmatprep.subr.mxu0 0.0
    %2617 = vmatpush2.msra.mxu0 0.0
    %2618 = vmatprep.mubr.f32.mxu0 0.0
    %2619 = vmatmul.mubr.f32.gmra.mxu0 %v2339
    %v2620 = vpop.f32.mrf.mxu0
    %v2621 = vadd.f32 0.0, %v2620
    %v2622 = vpop.f32.mrf.mxu0
    %2623 = vdwg.mxu0
    %2624 = vmatprep.subr.mxu0 0.0
    %2625 = vmatpush1.msra.mxu0 %v2100
    %2626 = vmatprep.subr.mxu0 0.0
    %2627 = vmatpush1.msra.mxu0 %v2099
    %2628 = vmatprep.subr.mxu0 0.0
    %2629 = vmatpush1.msra.mxu0 %v2098
    %2630 = vmatprep.subr.mxu0 0.0
    %2631 = vmatpush1.msra.mxu0 %v2097
    %2632 = vmatprep.subr.mxu0 0.0
    %2633 = vmatpush1.msra.mxu0 %v2096
    %2634 = vmatprep.subr.mxu0 0.0
    %2635 = vmatpush1.msra.mxu0 %v2095
    %2636 = vmatprep.subr.mxu0 0.0
    %2637 = vmatpush1.msra.mxu0 %v2094
    %2638 = vmatprep.subr.mxu0 0.0
    %2639 = vmatpush1.msra.mxu0 %v2093
    %2640 = vmatprep.subr.mxu0 0.0
    %2641 = vmatpush1.msra.mxu0 %v2092
    %2642 = vmatprep.subr.mxu0 0.0
    %2643 = vmatpush1.msra.mxu0 %v2091
    %2644 = vmatprep.subr.mxu0 0.0
    %2645 = vmatpush1.msra.mxu0 %v2090
    %2646 = vmatprep.subr.mxu0 0.0
    %2647 = vmatpush1.msra.mxu0 %v2089
    %2648 = vmatprep.subr.mxu0 0.0
    %2649 = vmatpush1.msra.mxu0 %v2088
    %2650 = vmatprep.subr.mxu0 0.0
    %2651 = vmatpush1.msra.mxu0 %v2087
    %2652 = vmatprep.subr.mxu0 0.0
    %2653 = vmatpush1.msra.mxu0 %v2086
    %2654 = vmatprep.subr.mxu0 0.0
    %2655 = vmatpush1.msra.mxu0 %v2085
    %2656 = vmatprep.subr.mxu0 0.0
    %2657 = vmatpush2.msra.mxu0 0.0
    %2658 = vmatprep.subr.mxu0 0.0
    %2659 = vmatpush2.msra.mxu0 0.0
    %2660 = vmatprep.subr.mxu0 0.0
    %2661 = vmatpush2.msra.mxu0 0.0
    %2662 = vmatprep.subr.mxu0 0.0
    %2663 = vmatpush2.msra.mxu0 0.0
    %2664 = vmatprep.subr.mxu0 0.0
    %2665 = vmatpush2.msra.mxu0 0.0
    %2666 = vmatprep.subr.mxu0 0.0
    %2667 = vmatpush2.msra.mxu0 0.0
    %2668 = vmatprep.subr.mxu0 0.0
    %2669 = vmatpush2.msra.mxu0 0.0
    %2670 = vmatprep.subr.mxu0 0.0
    %2671 = vmatpush2.msra.mxu0 0.0
    %2672 = vmatprep.subr.mxu0 0.0
    %2673 = vmatpush2.msra.mxu0 0.0
    %2674 = vmatprep.subr.mxu0 0.0
    %2675 = vmatpush2.msra.mxu0 0.0
    %2676 = vmatprep.subr.mxu0 0.0
    %2677 = vmatpush2.msra.mxu0 0.0
    %2678 = vmatprep.subr.mxu0 0.0
    %2679 = vmatpush2.msra.mxu0 0.0
    %2680 = vmatprep.subr.mxu0 0.0
    %2681 = vmatpush2.msra.mxu0 0.0
    %2682 = vmatprep.subr.mxu0 0.0
    %2683 = vmatpush2.msra.mxu0 0.0
    %2684 = vmatprep.subr.mxu0 0.0
    %2685 = vmatpush2.msra.mxu0 0.0
    %2686 = vmatprep.subr.mxu0 0.0
    %2687 = vmatpush2.msra.mxu0 0.0
    %2688 = vmatprep.mubr.f32.mxu0 0.0
    %2689 = vmatmul.mubr.f32.gmra.mxu0 %v2340
    %v2690 = vpop.f32.mrf.mxu0
    %v2691 = vadd.f32 0.0, %v2690
    %v2692 = vpop.f32.mrf.mxu0
    %2693 = vdwg.mxu0
    %2694 = vmatprep.subr.mxu0 0.0
    %2695 = vmatpush1.msra.mxu0 %v2116
    %2696 = vmatprep.subr.mxu0 0.0
    %2697 = vmatpush1.msra.mxu0 %v2115
    %2698 = vmatprep.subr.mxu0 0.0
    %2699 = vmatpush1.msra.mxu0 %v2114
    %2700 = vmatprep.subr.mxu0 0.0
    %2701 = vmatpush1.msra.mxu0 %v2113
    %2702 = vmatprep.subr.mxu0 0.0
    %2703 = vmatpush1.msra.mxu0 %v2112
    %2704 = vmatprep.subr.mxu0 0.0
    %2705 = vmatpush1.msra.mxu0 %v2111
    %2706 = vmatprep.subr.mxu0 0.0
    %2707 = vmatpush1.msra.mxu0 %v2110
    %2708 = vmatprep.subr.mxu0 0.0
    %2709 = vmatpush1.msra.mxu0 %v2109
    %2710 = vmatprep.subr.mxu0 0.0
    %2711 = vmatpush1.msra.mxu0 %v2108
    %2712 = vmatprep.subr.mxu0 0.0
    %2713 = vmatpush1.msra.mxu0 %v2107
    %2714 = vmatprep.subr.mxu0 0.0
    %2715 = vmatpush1.msra.mxu0 %v2106
    %2716 = vmatprep.subr.mxu0 0.0
    %2717 = vmatpush1.msra.mxu0 %v2105
    %2718 = vmatprep.subr.mxu0 0.0
    %2719 = vmatpush1.msra.mxu0 %v2104
    %2720 = vmatprep.subr.mxu0 0.0
    %2721 = vmatpush1.msra.mxu0 %v2103
    %2722 = vmatprep.subr.mxu0 0.0
    %2723 = vmatpush1.msra.mxu0 %v2102
    %2724 = vmatprep.subr.mxu0 0.0
    %2725 = vmatpush1.msra.mxu0 %v2101
    %2726 = vmatprep.subr.mxu0 0.0
    %2727 = vmatpush2.msra.mxu0 0.0
    %2728 = vmatprep.subr.mxu0 0.0
    %2729 = vmatpush2.msra.mxu0 0.0
    %2730 = vmatprep.subr.mxu0 0.0
    %2731 = vmatpush2.msra.mxu0 0.0
    %2732 = vmatprep.subr.mxu0 0.0
    %2733 = vmatpush2.msra.mxu0 0.0
    %2734 = vmatprep.subr.mxu0 0.0
    %2735 = vmatpush2.msra.mxu0 0.0
    %2736 = vmatprep.subr.mxu0 0.0
    %2737 = vmatpush2.msra.mxu0 0.0
    %2738 = vmatprep.subr.mxu0 0.0
    %2739 = vmatpush2.msra.mxu0 0.0
    %2740 = vmatprep.subr.mxu0 0.0
    %2741 = vmatpush2.msra.mxu0 0.0
    %2742 = vmatprep.subr.mxu0 0.0
    %2743 = vmatpush2.msra.mxu0 0.0
    %2744 = vmatprep.subr.mxu0 0.0
    %2745 = vmatpush2.msra.mxu0 0.0
    %2746 = vmatprep.subr.mxu0 0.0
    %2747 = vmatpush2.msra.mxu0 0.0
    %2748 = vmatprep.subr.mxu0 0.0
    %2749 = vmatpush2.msra.mxu0 0.0
    %2750 = vmatprep.subr.mxu0 0.0
    %2751 = vmatpush2.msra.mxu0 0.0
    %2752 = vmatprep.subr.mxu0 0.0
    %2753 = vmatpush2.msra.mxu0 0.0
    %2754 = vmatprep.subr.mxu0 0.0
    %2755 = vmatpush2.msra.mxu0 0.0
    %2756 = vmatprep.subr.mxu0 0.0
    %2757 = vmatpush2.msra.mxu0 0.0
    %2758 = vmatprep.mubr.f32.mxu0 0.0
    %2759 = vmatmul.mubr.f32.gmra.mxu0 %v2341
    %v2760 = vpop.f32.mrf.mxu0
    %v2761 = vadd.f32 0.0, %v2760
    %v2762 = vpop.f32.mrf.mxu0
    %2763 = vdwg.mxu0
    %2764 = vmatprep.subr.mxu0 0.0
    %2765 = vmatpush1.msra.mxu0 %v2132
    %2766 = vmatprep.subr.mxu0 0.0
    %2767 = vmatpush1.msra.mxu0 %v2131
    %2768 = vmatprep.subr.mxu0 0.0
    %2769 = vmatpush1.msra.mxu0 %v2130
    %2770 = vmatprep.subr.mxu0 0.0
    %2771 = vmatpush1.msra.mxu0 %v2129
    %2772 = vmatprep.subr.mxu0 0.0
    %2773 = vmatpush1.msra.mxu0 %v2128
    %2774 = vmatprep.subr.mxu0 0.0
    %2775 = vmatpush1.msra.mxu0 %v2127
    %2776 = vmatprep.subr.mxu0 0.0
    %2777 = vmatpush1.msra.mxu0 %v2126
    %2778 = vmatprep.subr.mxu0 0.0
    %2779 = vmatpush1.msra.mxu0 %v2125
    %2780 = vmatprep.subr.mxu0 0.0
    %2781 = vmatpush1.msra.mxu0 %v2124
    %2782 = vmatprep.subr.mxu0 0.0
    %2783 = vmatpush1.msra.mxu0 %v2123
    %2784 = vmatprep.subr.mxu0 0.0
    %2785 = vmatpush1.msra.mxu0 %v2122
    %2786 = vmatprep.subr.mxu0 0.0
    %2787 = vmatpush1.msra.mxu0 %v2121
    %2788 = vmatprep.subr.mxu0 0.0
    %2789 = vmatpush1.msra.mxu0 %v2120
    %2790 = vmatprep.subr.mxu0 0.0
    %2791 = vmatpush1.msra.mxu0 %v2119
    %2792 = vmatprep.subr.mxu0 0.0
    %2793 = vmatpush1.msra.mxu0 %v2118
    %2794 = vmatprep.subr.mxu0 0.0
    %2795 = vmatpush1.msra.mxu0 %v2117
    %2796 = vmatprep.subr.mxu0 0.0
    %2797 = vmatpush2.msra.mxu0 0.0
    %2798 = vmatprep.subr.mxu0 0.0
    %2799 = vmatpush2.msra.mxu0 0.0
    %2800 = vmatprep.subr.mxu0 0.0
    %2801 = vmatpush2.msra.mxu0 0.0
    %2802 = vmatprep.subr.mxu0 0.0
    %2803 = vmatpush2.msra.mxu0 0.0
    %2804 = vmatprep.subr.mxu0 0.0
    %2805 = vmatpush2.msra.mxu0 0.0
    %2806 = vmatprep.subr.mxu0 0.0
    %2807 = vmatpush2.msra.mxu0 0.0
    %2808 = vmatprep.subr.mxu0 0.0
    %2809 = vmatpush2.msra.mxu0 0.0
    %2810 = vmatprep.subr.mxu0 0.0
    %2811 = vmatpush2.msra.mxu0 0.0
    %2812 = vmatprep.subr.mxu0 0.0
    %2813 = vmatpush2.msra.mxu0 0.0
    %2814 = vmatprep.subr.mxu0 0.0
    %2815 = vmatpush2.msra.mxu0 0.0
    %2816 = vmatprep.subr.mxu0 0.0
    %2817 = vmatpush2.msra.mxu0 0.0
    %2818 = vmatprep.subr.mxu0 0.0
    %2819 = vmatpush2.msra.mxu0 0.0
    %2820 = vmatprep.subr.mxu0 0.0
    %2821 = vmatpush2.msra.mxu0 0.0
    %2822 = vmatprep.subr.mxu0 0.0
    %2823 = vmatpush2.msra.mxu0 0.0
    %2824 = vmatprep.subr.mxu0 0.0
    %2825 = vmatpush2.msra.mxu0 0.0
    %2826 = vmatprep.subr.mxu0 0.0
    %2827 = vmatpush2.msra.mxu0 0.0
    %2828 = vmatprep.mubr.f32.mxu0 0.0
    %2829 = vmatmul.mubr.f32.gmra.mxu0 %v2342
    %v2830 = vpop.f32.mrf.mxu0
    %v2831 = vadd.f32 0.0, %v2830
    %v2832 = vpop.f32.mrf.mxu0
    %2833 = vdwg.mxu0
    %2834 = vmatprep.subr.mxu0 0.0
    %2835 = vmatpush1.msra.mxu0 %v2148
    %2836 = vmatprep.subr.mxu0 0.0
    %2837 = vmatpush1.msra.mxu0 %v2147
    %2838 = vmatprep.subr.mxu0 0.0
    %2839 = vmatpush1.msra.mxu0 %v2146
    %2840 = vmatprep.subr.mxu0 0.0
    %2841 = vmatpush1.msra.mxu0 %v2145
    %2842 = vmatprep.subr.mxu0 0.0
    %2843 = vmatpush1.msra.mxu0 %v2144
    %2844 = vmatprep.subr.mxu0 0.0
    %2845 = vmatpush1.msra.mxu0 %v2143
    %2846 = vmatprep.subr.mxu0 0.0
    %2847 = vmatpush1.msra.mxu0 %v2142
    %2848 = vmatprep.subr.mxu0 0.0
    %2849 = vmatpush1.msra.mxu0 %v2141
    %2850 = vmatprep.subr.mxu0 0.0
    %2851 = vmatpush1.msra.mxu0 %v2140
    %2852 = vmatprep.subr.mxu0 0.0
    %2853 = vmatpush1.msra.mxu0 %v2139
    %2854 = vmatprep.subr.mxu0 0.0
    %2855 = vmatpush1.msra.mxu0 %v2138
    %2856 = vmatprep.subr.mxu0 0.0
    %2857 = vmatpush1.msra.mxu0 %v2137
    %2858 = vmatprep.subr.mxu0 0.0
    %2859 = vmatpush1.msra.mxu0 %v2136
    %2860 = vmatprep.subr.mxu0 0.0
    %2861 = vmatpush1.msra.mxu0 %v2135
    %2862 = vmatprep.subr.mxu0 0.0
    %2863 = vmatpush1.msra.mxu0 %v2134
    %2864 = vmatprep.subr.mxu0 0.0
    %2865 = vmatpush1.msra.mxu0 %v2133
    %2866 = vmatprep.subr.mxu0 0.0
    %2867 = vmatpush2.msra.mxu0 0.0
    %2868 = vmatprep.subr.mxu0 0.0
    %2869 = vmatpush2.msra.mxu0 0.0
    %2870 = vmatprep.subr.mxu0 0.0
    %2871 = vmatpush2.msra.mxu0 0.0
    %2872 = vmatprep.subr.mxu0 0.0
    %2873 = vmatpush2.msra.mxu0 0.0
    %2874 = vmatprep.subr.mxu0 0.0
    %2875 = vmatpush2.msra.mxu0 0.0
    %2876 = vmatprep.subr.mxu0 0.0
    %2877 = vmatpush2.msra.mxu0 0.0
    %2878 = vmatprep.subr.mxu0 0.0
    %2879 = vmatpush2.msra.mxu0 0.0
    %2880 = vmatprep.subr.mxu0 0.0
    %2881 = vmatpush2.msra.mxu0 0.0
    %2882 = vmatprep.subr.mxu0 0.0
    %2883 = vmatpush2.msra.mxu0 0.0
    %2884 = vmatprep.subr.mxu0 0.0
    %2885 = vmatpush2.msra.mxu0 0.0
    %2886 = vmatprep.subr.mxu0 0.0
    %2887 = vmatpush2.msra.mxu0 0.0
    %2888 = vmatprep.subr.mxu0 0.0
    %2889 = vmatpush2.msra.mxu0 0.0
    %2890 = vmatprep.subr.mxu0 0.0
    %2891 = vmatpush2.msra.mxu0 0.0
    %2892 = vmatprep.subr.mxu0 0.0
    %2893 = vmatpush2.msra.mxu0 0.0
    %2894 = vmatprep.subr.mxu0 0.0
    %2895 = vmatpush2.msra.mxu0 0.0
    %2896 = vmatprep.subr.mxu0 0.0
    %2897 = vmatpush2.msra.mxu0 0.0
    %2898 = vmatprep.mubr.f32.mxu0 0.0
    %2899 = vmatmul.mubr.f32.gmra.mxu0 %v2343
    %v2900 = vpop.f32.mrf.mxu0
    %v2901 = vadd.f32 0.0, %v2900
    %v2902 = vpop.f32.mrf.mxu0
    %2903 = vdwg.mxu0
    %v2904 = vadd.f32 %v42, 1.0
    %v2905 = vrcp.pop %v2904
    %v2906 = vmul.f32 %v2411, %v2905
    %v2907 = vmul.f32 %v2481, %v2905
    %v2908 = vmul.f32 %v2551, %v2905
    %v2909 = vmul.f32 %v2621, %v2905
    %v2910 = vmul.f32 %v2691, %v2905
    %v2911 = vmul.f32 %v2761, %v2905
    %v2912 = vmul.f32 %v2831, %v2905
    %v2913 = vmul.f32 %v2901, %v2905
    %v2914 = vmul.f32 %v2906, %v2906
    %v2915 = vmul.f32 %v2907, %v2907
    %v2916 = vmul.f32 %v2908, %v2908
    %v2917 = vmul.f32 %v2909, %v2909
    %v2918 = vmul.f32 %v2910, %v2910
    %v2919 = vmul.f32 %v2911, %v2911
    %v2920 = vmul.f32 %v2912, %v2912
    %v2921 = vmul.f32 %v2913, %v2913
    %v2930 = vrot.slane %v2914, 7
    %v2931 = vrot.slane %v2915, 7
    %v2932 = vrot.slane %v2916, 7
    %v2933 = vrot.slane %v2917, 7
    %v2934 = vrot.slane %v2918, 7
    %v2935 = vrot.slane %v2919, 7
    %v2936 = vrot.slane %v2920, 7
    %v2937 = vrot.slane %v2921, 7
    %v2946 = vsub.f32 %v2906, %v2930
    %v2947 = vsub.f32 %v2907, %v2931
    %v2948 = vsub.f32 %v2908, %v2932
    %v2949 = vsub.f32 %v2909, %v2933
    %v2950 = vsub.f32 %v2910, %v2934
    %v2951 = vsub.f32 %v2911, %v2935
    %v2952 = vsub.f32 %v2912, %v2936
    %v2953 = vsub.f32 %v2913, %v2937
    %v2962 = vrot.slane %v2946, 1
    %vm2963 = vcmask 1041409
    %v2964 = vsel %vm2963, %v2947, %v2962
    %v2965 = vrot.slane %v2948, 7
    %vm2966 = vcmask 1042434
    %v2967 = vsel %vm2966, %v2965, %v2964
    %v2968 = vrot.slane %v2949, 6
    %vm2969 = vcmask 1043459
    %v2970 = vsel %vm2969, %v2968, %v2967
    %v2971 = vrot.slane %v2950, 5
    %vm2972 = vcmask 1044484
    %v2973 = vsel %vm2972, %v2971, %v2970
    %v2974 = vrot.slane %v2951, 4
    %vm2975 = vcmask 1045509
    %v2976 = vsel %vm2975, %v2974, %v2973
    %v2977 = vrot.slane %v2952, 3
    %vm2978 = vcmask 1046534
    %v2979 = vsel %vm2978, %v2977, %v2976
    %v2980 = vrot.slane %v2953, 2
    %vm2981 = vcmask 1047559
    %v2982 = vsel %vm2981, %v2980, %v2979
    %v2984 = vmul.f32 %v2904, %v2982
    %v2985 = vsub.f32 1.0, %v2984
    %v2986 = vmul.f32 %v2985, %v2905
    %v2987 = vmax.f32 %v2986, 0.0
    %v2988 = vrsqrt.pop %v2987
    %v2989 = vmul.f32 %v2987, %v2988
    %vm2990 = vcmp.eq.f32.partialorder %v2987, inf
    %v2991 = vsel %vm2990, %v2987, %v2989
    %vm2992 = vcmp.eq.f32.partialorder %v2987, 0.0
    %v2993 = vand.u32 %v2987, 2147483648
    %v2994 = vsel %vm2992, %v2993, %v2991
    %v2996 = vrot.slane %v2994, 1
    %v2997 = vrot.slane %v2994, 2
    %v2998 = vrot.slane %v2994, 3
    %v2999 = vrot.slane %v2994, 4
    %v3000 = vrot.slane %v2994, 5
    %v3001 = vrot.slane %v2994, 6
    %v3002 = vrot.slane %v2994, 7
    %v3011 = vsub.f32 %v2906, %v2994
    %v3012 = vsub.f32 %v2907, %v2996
    %v3013 = vsub.f32 %v2908, %v2997
    %v3014 = vsub.f32 %v2909, %v2998
    %v3015 = vsub.f32 %v2910, %v2999
    %v3016 = vsub.f32 %v2911, %v3000
    %v3017 = vsub.f32 %v2912, %v3001
    %v3018 = vsub.f32 %v2913, %v3002
    %s3019 = scalar_lea.vmem [#allocation2], 128
    %v3020 = vld [vmem:[%s3019] sm:$0xff]
    %v3021 = vld [vmem:[%s3019 + $0x8] sm:$0xff]
    %v3022 = vld [vmem:[%s3019 + $0x10] sm:$0xff]
    %v3023 = vld [vmem:[%s3019 + $0x18] sm:$0xff]
    %v3024 = vld [vmem:[%s3019 + $0x20] sm:$0xff]
    %v3025 = vld [vmem:[%s3019 + $0x28] sm:$0xff]
    %v3026 = vld [vmem:[%s3019 + $0x30] sm:$0xff]
    %v3027 = vld [vmem:[%s3019 + $0x38] sm:$0xff]
    %v3028 = vld [vmem:[%s3019 + $0x40] sm:$0xff]
    %v3029 = vld [vmem:[%s3019 + $0x48] sm:$0xff]
    %v3030 = vld [vmem:[%s3019 + $0x50] sm:$0xff]
    %v3031 = vld [vmem:[%s3019 + $0x58] sm:$0xff]
    %v3032 = vld [vmem:[%s3019 + $0x60] sm:$0xff]
    %v3033 = vld [vmem:[%s3019 + $0x68] sm:$0xff]
    %v3034 = vld [vmem:[%s3019 + $0x70] sm:$0xff]
    %v3035 = vld [vmem:[%s3019 + $0x78] sm:$0xff]
    %v3044 = vrot.slane %v2481, 7
    %v3045 = vsel %vm2963, %v3044, %v2411
    %v3046 = vrot.slane %v2551, 6
    %v3047 = vsel %vm2966, %v3046, %v3045
    %v3048 = vrot.slane %v2621, 5
    %v3049 = vsel %vm2969, %v3048, %v3047
    %v3050 = vrot.slane %v2691, 4
    %v3051 = vsel %vm2972, %v3050, %v3049
    %v3052 = vrot.slane %v2761, 3
    %v3053 = vsel %vm2975, %v3052, %v3051
    %v3054 = vrot.slane %v2831, 2
    %v3055 = vsel %vm2978, %v3054, %v3053
    %v3056 = vrot.slane %v2901, 1
    %v3057 = vsel %vm2981, %v3056, %v3055
    %3059 = vmatprep.subr.mxu0 0.0
    %3060 = vmatpush1.msra.mxu0 %v3035
    %3061 = vmatprep.subr.mxu0 0.0
    %3062 = vmatpush1.msra.mxu0 %v3034
    %3063 = vmatprep.subr.mxu0 0.0
    %3064 = vmatpush1.msra.mxu0 %v3033
    %3065 = vmatprep.subr.mxu0 0.0
    %3066 = vmatpush1.msra.mxu0 %v3032
    %3067 = vmatprep.subr.mxu0 0.0
    %3068 = vmatpush1.msra.mxu0 %v3031
    %3069 = vmatprep.subr.mxu0 0.0
    %3070 = vmatpush1.msra.mxu0 %v3030
    %3071 = vmatprep.subr.mxu0 0.0
    %3072 = vmatpush1.msra.mxu0 %v3029
    %3073 = vmatprep.subr.mxu0 0.0
    %3074 = vmatpush1.msra.mxu0 %v3028
    %3075 = vmatprep.subr.mxu0 0.0
    %3076 = vmatpush1.msra.mxu0 %v3027
    %3077 = vmatprep.subr.mxu0 0.0
    %3078 = vmatpush1.msra.mxu0 %v3026
    %3079 = vmatprep.subr.mxu0 0.0
    %3080 = vmatpush1.msra.mxu0 %v3025
    %3081 = vmatprep.subr.mxu0 0.0
    %3082 = vmatpush1.msra.mxu0 %v3024
    %3083 = vmatprep.subr.mxu0 0.0
    %3084 = vmatpush1.msra.mxu0 %v3023
    %3085 = vmatprep.subr.mxu0 0.0
    %3086 = vmatpush1.msra.mxu0 %v3022
    %3087 = vmatprep.subr.mxu0 0.0
    %3088 = vmatpush1.msra.mxu0 %v3021
    %3089 = vmatprep.subr.mxu0 0.0
    %3090 = vmatpush1.msra.mxu0 %v3020
    %3091 = vmatprep.subr.mxu0 0.0
    %3092 = vmatpush2.msra.mxu0 0.0
    %3093 = vmatprep.subr.mxu0 0.0
    %3094 = vmatpush2.msra.mxu0 0.0
    %3095 = vmatprep.subr.mxu0 0.0
    %3096 = vmatpush2.msra.mxu0 0.0
    %3097 = vmatprep.subr.mxu0 0.0
    %3098 = vmatpush2.msra.mxu0 0.0
    %3099 = vmatprep.subr.mxu0 0.0
    %3100 = vmatpush2.msra.mxu0 0.0
    %3101 = vmatprep.subr.mxu0 0.0
    %3102 = vmatpush2.msra.mxu0 0.0
    %3103 = vmatprep.subr.mxu0 0.0
    %3104 = vmatpush2.msra.mxu0 0.0
    %3105 = vmatprep.subr.mxu0 0.0
    %3106 = vmatpush2.msra.mxu0 0.0
    %3107 = vmatprep.subr.mxu0 0.0
    %3108 = vmatpush2.msra.mxu0 0.0
    %3109 = vmatprep.subr.mxu0 0.0
    %3110 = vmatpush2.msra.mxu0 0.0
    %3111 = vmatprep.subr.mxu0 0.0
    %3112 = vmatpush2.msra.mxu0 0.0
    %3113 = vmatprep.subr.mxu0 0.0
    %3114 = vmatpush2.msra.mxu0 0.0
    %3115 = vmatprep.subr.mxu0 0.0
    %3116 = vmatpush2.msra.mxu0 0.0
    %3117 = vmatprep.subr.mxu0 0.0
    %3118 = vmatpush2.msra.mxu0 0.0
    %3119 = vmatprep.subr.mxu0 0.0
    %3120 = vmatpush2.msra.mxu0 0.0
    %3121 = vmatprep.subr.mxu0 0.0
    %3122 = vmatpush2.msra.mxu0 0.0
    %3123 = vmatprep.mubr.f32.mxu0 0.0
    %3124 = vmatmul.mubr.f32.gmra.mxu0 %v3057
    %v3125 = vpop.f32.mrf.mxu0
    %v3126 = vadd.f32 0.0, %v3125
    %v3127 = vpop.f32.mrf.mxu0
    %3128 = vdwg.mxu0
    %v3137 = vrot.slane %v3012, 7
    %v3138 = vsel %vm2963, %v3137, %v3011
    %v3139 = vrot.slane %v3013, 6
    %v3140 = vsel %vm2966, %v3139, %v3138
    %v3141 = vrot.slane %v3014, 5
    %v3142 = vsel %vm2969, %v3141, %v3140
    %v3143 = vrot.slane %v3015, 4
    %v3144 = vsel %vm2972, %v3143, %v3142
    %v3145 = vrot.slane %v3016, 3
    %v3146 = vsel %vm2975, %v3145, %v3144
    %v3147 = vrot.slane %v3017, 2
    %v3148 = vsel %vm2978, %v3147, %v3146
    %v3149 = vrot.slane %v3018, 1
    %v3150 = vsel %vm2981, %v3149, %v3148
    %vm3152 = vcmp.ge.f32.partialorder %v3126, %v3150
    %vm3153 = vmand %vm3152, %vm44
    %v3154 = vsel %vm3153, 1, 0
    %v3155 = vcvt.s32.f32 %v3154
    %3156 = vadd.xlane.f32.xlu0 %v3155
    %v3157 = vpop.xlane.xlu0 %3156
    %v3158 = vmax.f32 %v3157, 1.0
    %v3159 = vmin.f32 %v3158, 32.0
    %v3160 = vsub.f32 %v3159, 1.0
    %vm3161 = vcmp.eq.f32.partialorder %v42, %v3160
    %v3162 = vsel %vm3161, 1, 0
    %v3163 = vcvt.s32.f32 %v3162
    %v3165 = vrot.slane %v3163, 1
    %v3166 = vrot.slane %v3163, 2
    %v3167 = vrot.slane %v3163, 3
    %v3168 = vrot.slane %v3163, 4
    %v3169 = vrot.slane %v3163, 5
    %v3170 = vrot.slane %v3163, 6
    %v3171 = vrot.slane %v3163, 7
    %v3180 = vmul.f32 %v3011, %v3163
    %v3181 = vmul.f32 %v3012, %v3165
    %v3182 = vmul.f32 %v3013, %v3166
    %v3183 = vmul.f32 %v3014, %v3167
    %v3184 = vmul.f32 %v3015, %v3168
    %v3185 = vmul.f32 %v3016, %v3169
    %v3186 = vmul.f32 %v3017, %v3170
    %v3187 = vmul.f32 %v3018, %v3171
    %v3196 = vrot.slane %v3181, 7
    %v3197 = vsel %vm2963, %v3196, %v3180
    %v3198 = vrot.slane %v3182, 6
    %v3199 = vsel %vm2966, %v3198, %v3197
    %v3200 = vrot.slane %v3183, 5
    %v3201 = vsel %vm2969, %v3200, %v3199
    %v3202 = vrot.slane %v3184, 4
    %v3203 = vsel %vm2972, %v3202, %v3201
    %v3204 = vrot.slane %v3185, 3
    %v3205 = vsel %vm2975, %v3204, %v3203
    %v3206 = vrot.slane %v3186, 2
    %v3207 = vsel %vm2978, %v3206, %v3205
    %v3208 = vrot.slane %v3187, 1
    %v3209 = vsel %vm2981, %v3208, %v3207
    %3211 = vadd.xlane.f32.xlu0 %v3209
    %v3212 = vpop.xlane.xlu0 %3211
    %v3213 = vsub.f32 %v50, %v3212
    %v3214 = vmax.f32 %v3213, 0.0
    %v3215 = vmul.f32 %v3214, %v3214
    %3216 = vadd.xlane.f32.xlu0 %v3215
    %v3217 = vpop.xlane.xlu0 %3216
    %v3218 = vadd.f32 %v3217, 1e-08
    %v3219 = vrcp.pop %v3218
    %v3220 = vmul.f32 %v3215, %v3219
    %3221 = vst [vmem:[#allocation7] sm:$0xff] %v3220
    // Predicated region
    $region18: #{tpu_custom_call.1} parent=1 // pred_check
      _
    $region19: #{tpu_custom_call.1} parent=1 // pred_check_branch
      %3223 = sbr.rel (0) target = $region21
    $region20: #{tpu_custom_call.1} parent=1 // pred_region
      %s3225 = ssub.s32 128, 128
      %3226 = vsyncadd [#allocation4], %s3225
      %s3228 = sshll.u32 [#allocation7], 4
      %s3229 = int_to_ptr.vmem [resolvable:$true] %s3228
      %3231 = dma.vmem_to_hbm [thread:$0]  %s3229, 128, %s2, [#allocation4]
    $region21: #{tpu_custom_call.1} parent=1 // pred_fallthru
      _
    // Predicated region
    $region22: #{tpu_custom_call.1} parent=1 // pred_check
      _
    $region23: #{tpu_custom_call.1} parent=1 // pred_check_branch
      %3233 = sbr.rel (0) target = $region25
    $region24: #{tpu_custom_call.1} parent=1 // pred_region
      %3234 = dma.done [#allocation4], 128
    $region25: #{tpu_custom_call.1} parent=1 // pred_fallthru
      _
    %3235 = vsyncpa [#allocation3], 1
    %3236 = vsyncpa [#allocation6], 1
    %3237 = vsyncpa [#allocation4], 1

</llo_original>
